<compile_context>
chip_gen: v7x
topology: tpu7x:2x2x1
jax: 0.10.0
libtpu: 0.0.40
codegen_flags: <defaults>
</compile_context>

<pallas_src>
import jax
import jax.numpy as jnp
from jax.experimental import pallas as pl
from jax.experimental.pallas import tpu as pltpu

_K = 4            # every conv in the module uses kernel_size=4
_NEG_SLOPE = 0.2  # LeakyReLU slope


# ----------------------------------------------------------------- kernel ----
def _make_fused_kernel(B, L1h, L2, L3, L4, C1, C2):
    """Whole discriminator for a block of B batch rows (all sizes static)."""

    def leaky(h):
        return jnp.where(h > 0, h, _NEG_SLOPE * h)

    def kernel(xq_ref, w1_ref, b1_ref, w2_ref, b2_ref, w3_ref, b3_ref,
               w4_ref, b4_ref, o_ref):
        half = xq_ref.shape[-1] // 2          # 2 * Cin_pad (= two packed timesteps)
        w1 = w1_ref[...]
        w2 = w2_ref[...]
        w3 = w3_ref[...]
        b1 = b1_ref[...]

        # ---- conv1: Conv1d(104->64, k=4, s=2, p=1) + LeakyReLU -----------------
        # Input is pre-packed as quads of padded timesteps along lanes, so the
        # stride-2 conv becomes two stride-1 matmuls (even / odd output rows)
        # built from contiguous slices only.  The B batch rows are stacked on
        # sublanes so each dot has M = B * L1h.
        xk_e = jnp.concatenate([xq_ref[b, 0:L1h, :] for b in range(B)], axis=0)
        xk_o = jnp.concatenate(
            [jnp.concatenate([xq_ref[b, 0:L1h, half:],
                              xq_ref[b, 1:L1h + 1, :half]], axis=-1)
             for b in range(B)], axis=0)
        h1e = leaky(jnp.dot(xk_e, w1, preferred_element_type=jnp.float32) + b1)
        h1o = leaky(jnp.dot(xk_o, w1, preferred_element_type=jnp.float32) + b1)
        # h1e[b*L1h + m] == h1[b, 2m],  h1o[b*L1h + m] == h1[b, 2m+1]   (f32)

        # ---- conv2: ConvNormRelu(64->128, k=4, s=2, p=1), BN folded ------------
        # Stride-2 taps expressed on the parity-split conv1 output:
        #   tap0 = h1[2j-1] (0 at j=0), tap1 = h1[2j], tap2 = h1[2j+1],
        #   tap3 = h1[2j+2] (0 at the last j)
        z1 = jnp.zeros((1, C1), jnp.float32)
        tap0, tap3 = [], []
        for b in range(B):
            e = h1e[b * L1h:(b + 1) * L1h]
            o = h1o[b * L1h:(b + 1) * L1h]
            tap0.append(jnp.concatenate([z1, o[:L2 - 1]], axis=0))
            tap3.append(jnp.concatenate([e[1:L2], z1], axis=0))
        xk2 = jnp.concatenate(
            [jnp.concatenate(tap0, axis=0), h1e, h1o,
             jnp.concatenate(tap3, axis=0)], axis=-1).astype(w2.dtype)
        h2 = leaky(jnp.dot(xk2, w2, preferred_element_type=jnp.float32)
                   + b2_ref[...])                              # (B*L2, 128) f32

        # ---- conv3: ConvNormRelu(128->256, k=4, s=1, p=1), BN folded -----------
        z2 = jnp.zeros((1, C2), jnp.float32)
        xk3_rows = []
        for b in range(B):
            h2p = jnp.concatenate([z2, h2[b * L2:(b + 1) * L2], z2], axis=0)
            xk3_rows.append(
                jnp.concatenate([h2p[k:k + L3] for k in range(_K)], axis=-1))
        xk3 = jnp.concatenate(xk3_rows, axis=0).astype(w3.dtype)
        h3 = leaky(jnp.dot(xk3, w3, preferred_element_type=jnp.float32)
                   + b3_ref[...])                              # (B*L3, 256) f32

        # ---- logits: Conv1d(256->1, k=4, s=1, p=0) -----------------------------
        # Cout=1 -> VPU multiply + lane reduction (keeps the MXU for the convs),
        # result naturally lands time-on-lanes for a lane-dense store.
        w4 = w4_ref[...]                                       # (1, 4*C3) f32
        b4 = b4_ref[0, 0]
        rows = []
        for b in range(B):
            h3b = h3[b * L3:(b + 1) * L3]
            xk4 = jnp.concatenate([h3b[k:k + L4] for k in range(_K)], axis=-1)
            rows.append(jnp.sum(xk4 * w4, axis=-1) + b4)       # (L4,)
        o_ref[...] = jnp.stack(rows, axis=0)[:, None, :].astype(o_ref.dtype)

    return kernel


# ----------------------------------------------------------------- params ----
def _conv_matrix(key, Cin, Cout, K=_K, cin_pad=None):
    """PyTorch-default-init Conv1d as a (K*Cin[_pad], Cout) im2col matmul weight."""
    kw, kb = jax.random.split(key)
    bound = 1.0 / (Cin * K) ** 0.5
    w = jax.random.uniform(kw, (Cout, Cin, K), jnp.float32, -bound, bound)
    b = jax.random.uniform(kb, (Cout,), jnp.float32, -bound, bound)
    w_kio = jnp.transpose(w, (2, 1, 0))                       # (K, Cin, Cout)
    if cin_pad is not None and cin_pad > Cin:                 # zero rows for padded lanes
        w_kio = jnp.pad(w_kio, ((0, 0), (0, cin_pad - Cin), (0, 0)))
    return w_kio.reshape(-1, Cout), b


def _bn_params(key, C):
    k1, k2, k3, k4 = jax.random.split(key, 4)
    gamma = 1.0 + 0.1 * jax.random.normal(k1, (C,), jnp.float32)
    beta = 0.1 * jax.random.normal(k2, (C,), jnp.float32)
    mean = 0.1 * jax.random.normal(k3, (C,), jnp.float32)
    var = 1.0 + 0.1 * jax.random.uniform(k4, (C,), jnp.float32)
    return gamma, beta, mean, var


def _fold_bn(w_mat, b, bn, eps=1e-5):
    """Eval-mode BatchNorm1d folded into the conv: w'=w*s, b'=s*(b-mean)+beta."""
    gamma, beta, mean, var = bn
    scale = gamma * jax.lax.rsqrt(var + eps)
    return w_mat * scale[None, :], scale * (b - mean) + beta


def init_speech2gesture_d(key, in_channels=104, out_channels=64,
                          n_downsampling=2, out_shape=1):
    # Default architecture only (n_downsampling=2, groups=1, p=0), as in the module.
    ks = jax.random.split(key, 6)
    ch_mul = min(2 ** (n_downsampling - 1), 8)
    ch_mul_new = min(2 ** n_downsampling, 8)
    C1, C2, C3 = out_channels, out_channels * ch_mul, out_channels * ch_mul_new

    cin_pad = ((in_channels + 127) // 128) * 128              # 104 -> 128 lanes
    w1, b1 = _conv_matrix(ks[0], in_channels, C1, cin_pad=cin_pad)           # conv1
    w2, b2 = _fold_bn(*_conv_matrix(ks[1], C1, C2), _bn_params(ks[2], C2))   # conv2+BN
    w3, b3 = _fold_bn(*_conv_matrix(ks[3], C2, C3), _bn_params(ks[4], C3))   # conv3+BN
    w4, b4 = _conv_matrix(ks[5], C3, out_shape)                              # logits
    return ((w1, b1.reshape(1, -1)), (w2, b2.reshape(1, -1)),
            (w3, b3.reshape(1, -1)), (w4, b4.reshape(1, -1)))


# ---------------------------------------------------------------- forward ----
def speech2gesture_d_forward(params, x, block_rows=None):
    """x: (N, time, pose_feats=104) -> (scores (N, T_out), internal_losses=[])."""
    (w1, b1), (w2, b2), (w3, b3), (w4, b4) = params
    N, T, Cin = x.shape
    # TODO(synk): support T not divisible by 4 (odd conv1/conv2 output lengths).
    assert T % 4 == 0, "this kernel assumes the sequence length is a multiple of 4"
    Cin_pad = w1.shape[0] // _K                 # input channels padded to 128 lanes
    C1, C2, C3 = b1.shape[-1], b2.shape[-1], b3.shape[-1]

    # Static layer geometry (k=4 everywhere; strides 2,2,1,1; pads 1,1,1,0).
    L1 = T // 2
    L1h = L1 // 2               # number of even (= odd) conv1 output rows
    L2 = T // 4
    L3 = L2 - 1
    L4 = L3 - 3
    assert L4 >= 1, "sequence too short for this discriminator"
    Q = L1h + 1                 # quad-packed padded-time rows per batch item

    # Rows per grid step: fill MXU sublanes, but keep >= 2 grid steps when we can
    # (v7x has 2 TensorCores sharing the grid).
    B = block_rows if block_rows is not None else min(8, N)
    while B > 1 and (N + B - 1) // B < 2:
        B //= 2
    N_pad = ((N + B - 1) // B) * B

    # One tiny XLA prep chain: pad batch/time/channels, pack 4 timesteps per row
    # along lanes (so stride-2 taps become contiguous lane slices), cast to bf16.
    xq = jnp.pad(x, ((0, N_pad - N), (1, 3), (0, Cin_pad - Cin)))
    xq = xq.reshape(N_pad, Q, _K * Cin_pad).astype(jnp.bfloat16)

    w1b, w2b, w3b = (w.astype(jnp.bfloat16) for w in (w1, w2, w3))
    w4v = w4.reshape(1, -1)                      # (1, 4*C3) f32 row for VPU reduce
    b4v = b4.reshape(1, 1)

    def rep(a):  # whole-array block, identical every grid step (weights / biases)
        return pl.BlockSpec(a.shape, lambda n, nd=a.ndim: (0,) * nd)

    grid_spec = pltpu.PrefetchScalarGridSpec(
        num_scalar_prefetch=0,
        grid=(N_pad // B,),
        in_specs=[
            pl.BlockSpec((B, Q, _K * Cin_pad), lambda n: (n, 0, 0)),
            rep(w1b), rep(b1), rep(w2b), rep(b2),
            rep(w3b), rep(b3), rep(w4v), rep(b4v),
        ],
        out_specs=pl.BlockSpec((B, 1, L4), lambda n: (n, 0, 0)),
    )

    out = pl.pallas_call(
        _make_fused_kernel(B, L1h, L2, L3, L4, C1, C2),
        out_shape=jax.ShapeDtypeStruct((N_pad, 1, L4), jnp.float32),
        grid_spec=grid_spec,
        compiler_params=pltpu.CompilerParams(
            dimension_semantics=("parallel",)),   # batch blocks -> 2 TCs on v7x
    )(xq, w1b, b1, w2b, b2, w3b, b3, w4v, b4v)

    # PyTorch: x.transpose(-1,-2).squeeze(dim=-1); kernel output is (N_pad, 1, T_out).
    return out[:N, 0, :], []


# ------------------------------------------------------------- reference -----
def _reference_forward(params, x):
    """Pure-JAX f32 reference using the same folded matrices (sanity check)."""
    def conv(h, w, b, stride, pad, leaky):
        Cin = w.shape[0] // _K
        if h.shape[-1] < Cin:
            h = jnp.pad(h, ((0, 0), (0, 0), (0, Cin - h.shape[-1])))
        if pad:
            h = jnp.pad(h, ((0, 0), (pad, pad), (0, 0)))
        L = (h.shape[1] - _K) // stride + 1
        taps = jnp.concatenate(
            [h[:, k:k + stride * (L - 1) + 1:stride, :] for k in range(_K)], axis=-1)
        y = jnp.einsum('nlc,co->nlo', taps, w,
                       precision=jax.lax.Precision.HIGHEST) + b
        return jnp.where(y > 0, y, _NEG_SLOPE * y) if leaky else y

    (w1, b1), (w2, b2), (w3, b3), (w4, b4) = params
    h = conv(x, w1, b1, 2, 1, True)
    h = conv(h, w2, b2, 2, 1, True)
    h = conv(h, w3, b3, 1, 1, True)
    h = conv(h, w4, b4, 1, 0, False)
    return h[..., 0]


if __name__ == "__main__":
    key = jax.random.PRNGKey(0)
    pkey, xkey = jax.random.split(key)
    N, T, FEAT = 4, 32, 104          # pose_feats is fixed to 104 by the module
    x = jax.random.normal(xkey, (N, T, FEAT), jnp.float32)
    params = init_speech2gesture_d(pkey)

    fwd = jax.jit(speech2gesture_d_forward)
    scores, internal_losses = fwd(params, x)
    jax.block_until_ready(scores)

    # T=32 -> conv1:16 -> conv2:8 -> conv3:7 -> logits:4
    assert scores.shape == (N, T // 4 - 4), scores.shape
    assert internal_losses == []
    ref = _reference_forward(params, x)
    err = float(jnp.max(jnp.abs(scores - ref)))
    assert jnp.allclose(scores, ref, atol=2e-2, rtol=2e-2), err
    print("KERNEL_OK")
</pallas_src>

<mosaic_0001>
module attributes {stable_mosaic.version = 11 : i64} {
  func.func @kernel(%arg0: i32, %arg1: memref<2x9x512xbf16, #tpu.memory_space<vmem>>, %arg2: memref<512x64xbf16, #tpu.memory_space<vmem>>, %arg3: memref<1x64xf32, #tpu.memory_space<vmem>>, %arg4: memref<256x128xbf16, #tpu.memory_space<vmem>>, %arg5: memref<1x128xf32, #tpu.memory_space<vmem>>, %arg6: memref<512x256xbf16, #tpu.memory_space<vmem>>, %arg7: memref<1x256xf32, #tpu.memory_space<vmem>>, %arg8: memref<1x1024xf32, #tpu.memory_space<vmem>>, %arg9: memref<1x1xf32, #tpu.memory_space<vmem>>, %arg10: memref<2x1x4xf32, #tpu.memory_space<vmem>>) attributes {dimension_semantics = [#tpu.dimension_semantics<parallel>], iteration_bounds = array<i64: 2>, scalar_prefetch = 0 : i64, scratch_operands = 0 : i64, tpu.core_type = #tpu.core_type<tc>, window_params = [{transform_indices = @transform_0, window_bounds = array<i64: 2, 9, 512>}, {pipeline_mode = #tpu.pipeline_mode<synchronous>, transform_indices = @transform_1, window_bounds = array<i64: 512, 64>}, {pipeline_mode = #tpu.pipeline_mode<synchronous>, transform_indices = @transform_2, window_bounds = array<i64: 1, 64>}, {pipeline_mode = #tpu.pipeline_mode<synchronous>, transform_indices = @transform_3, window_bounds = array<i64: 256, 128>}, {pipeline_mode = #tpu.pipeline_mode<synchronous>, transform_indices = @transform_4, window_bounds = array<i64: 1, 128>}, {pipeline_mode = #tpu.pipeline_mode<synchronous>, transform_indices = @transform_5, window_bounds = array<i64: 512, 256>}, {pipeline_mode = #tpu.pipeline_mode<synchronous>, transform_indices = @transform_6, window_bounds = array<i64: 1, 256>}, {pipeline_mode = #tpu.pipeline_mode<synchronous>, transform_indices = @transform_7, window_bounds = array<i64: 1, 1024>}, {pipeline_mode = #tpu.pipeline_mode<synchronous>, transform_indices = @transform_8, window_bounds = array<i64: 1, 1>}, {transform_indices = @transform_9, window_bounds = array<i64: 2, 1, 4>}]} {
    %c0 = arith.constant 0 : index
    %c0_0 = arith.constant 0 : index
    %0 = vector.load %arg2[%c0, %c0_0] : memref<512x64xbf16, #tpu.memory_space<vmem>>, vector<512x64xbf16>
    %c0_1 = arith.constant 0 : index
    %c0_2 = arith.constant 0 : index
    %1 = vector.load %arg4[%c0_1, %c0_2] : memref<256x128xbf16, #tpu.memory_space<vmem>>, vector<256x128xbf16>
    %c0_3 = arith.constant 0 : index
    %c0_4 = arith.constant 0 : index
    %2 = vector.load %arg6[%c0_3, %c0_4] : memref<512x256xbf16, #tpu.memory_space<vmem>>, vector<512x256xbf16>
    %c0_5 = arith.constant 0 : index
    %c0_6 = arith.constant 0 : index
    %3 = vector.load %arg3[%c0_5, %c0_6] : memref<1x64xf32, #tpu.memory_space<vmem>>, vector<1x64xf32>
    %c0_7 = arith.constant 0 : index
    %c0_8 = arith.constant 0 : index
    %c0_9 = arith.constant 0 : index
    %4 = vector.load %arg1[%c0_7, %c0_8, %c0_9] : memref<2x9x512xbf16, #tpu.memory_space<vmem>>, vector<1x8x512xbf16>
    %5 = vector.shape_cast %4 : vector<1x8x512xbf16> to vector<8x512xbf16>
    %c1 = arith.constant 1 : index
    %c0_10 = arith.constant 0 : index
    %c0_11 = arith.constant 0 : index
    %6 = vector.load %arg1[%c1, %c0_10, %c0_11] : memref<2x9x512xbf16, #tpu.memory_space<vmem>>, vector<1x8x512xbf16>
    %7 = vector.shape_cast %6 : vector<1x8x512xbf16> to vector<8x512xbf16>
    %8 = tpu.concatenate %5, %7 in 0 : vector<8x512xbf16>, vector<8x512xbf16> -> vector<16x512xbf16>
    %c0_12 = arith.constant 0 : index
    %c0_13 = arith.constant 0 : index
    %c256 = arith.constant 256 : index
    %9 = vector.load %arg1[%c0_12, %c0_13, %c256] : memref<2x9x512xbf16, #tpu.memory_space<vmem>>, vector<1x8x256xbf16>
    %10 = vector.shape_cast %9 : vector<1x8x256xbf16> to vector<8x256xbf16>
    %c0_14 = arith.constant 0 : index
    %c1_15 = arith.constant 1 : index
    %c0_16 = arith.constant 0 : index
    %11 = vector.load %arg1[%c0_14, %c1_15, %c0_16] : memref<2x9x512xbf16, #tpu.memory_space<vmem>>, vector<1x8x256xbf16>
    %12 = vector.shape_cast %11 : vector<1x8x256xbf16> to vector<8x256xbf16>
    %13 = tpu.concatenate %10, %12 in 1 : vector<8x256xbf16>, vector<8x256xbf16> -> vector<8x512xbf16>
    %c1_17 = arith.constant 1 : index
    %c0_18 = arith.constant 0 : index
    %c256_19 = arith.constant 256 : index
    %14 = vector.load %arg1[%c1_17, %c0_18, %c256_19] : memref<2x9x512xbf16, #tpu.memory_space<vmem>>, vector<1x8x256xbf16>
    %15 = vector.shape_cast %14 : vector<1x8x256xbf16> to vector<8x256xbf16>
    %c1_20 = arith.constant 1 : index
    %c1_21 = arith.constant 1 : index
    %c0_22 = arith.constant 0 : index
    %16 = vector.load %arg1[%c1_20, %c1_21, %c0_22] : memref<2x9x512xbf16, #tpu.memory_space<vmem>>, vector<1x8x256xbf16>
    %17 = vector.shape_cast %16 : vector<1x8x256xbf16> to vector<8x256xbf16>
    %18 = tpu.concatenate %15, %17 in 1 : vector<8x256xbf16>, vector<8x256xbf16> -> vector<8x512xbf16>
    %19 = tpu.concatenate %13, %18 in 0 : vector<8x512xbf16>, vector<8x512xbf16> -> vector<16x512xbf16>
    %cst = arith.constant dense<0.000000e+00> : vector<16x64xf32>
    %20 = tpu.matmul %8, %0, %cst {dimension_numbers = #tpu.dot_dimension_numbers<[1], [0], [0], [1], [0, 0, 1, 1], [], []>} : vector<16x512xbf16>, vector<512x64xbf16>, vector<16x64xf32> -> vector<16x64xf32>
    %21 = vector.broadcast %3 : vector<1x64xf32> to vector<16x64xf32>
    %22 = arith.addf %20, %21 : vector<16x64xf32>
    %cst_23 = arith.constant 0.000000e+00 : f32
    %23 = vector.broadcast %cst_23 : f32 to vector<16x64xf32>
    %24 = arith.cmpf ogt, %22, %23 : vector<16x64xf32>
    %cst_24 = arith.constant 2.000000e-01 : f32
    %25 = vector.broadcast %cst_24 : f32 to vector<16x64xf32>
    %26 = arith.mulf %25, %22 : vector<16x64xf32>
    %27 = arith.select %24, %22, %26 : vector<16x64xi1>, vector<16x64xf32>
    %cst_25 = arith.constant dense<0.000000e+00> : vector<16x64xf32>
    %28 = tpu.matmul %19, %0, %cst_25 {dimension_numbers = #tpu.dot_dimension_numbers<[1], [0], [0], [1], [0, 0, 1, 1], [], []>} : vector<16x512xbf16>, vector<512x64xbf16>, vector<16x64xf32> -> vector<16x64xf32>
    %29 = vector.broadcast %3 : vector<1x64xf32> to vector<16x64xf32>
    %30 = arith.addf %28, %29 : vector<16x64xf32>
    %cst_26 = arith.constant 0.000000e+00 : f32
    %31 = vector.broadcast %cst_26 : f32 to vector<16x64xf32>
    %32 = arith.cmpf ogt, %30, %31 : vector<16x64xf32>
    %cst_27 = arith.constant 2.000000e-01 : f32
    %33 = vector.broadcast %cst_27 : f32 to vector<16x64xf32>
    %34 = arith.mulf %33, %30 : vector<16x64xf32>
    %35 = arith.select %32, %30, %34 : vector<16x64xi1>, vector<16x64xf32>
    %cst_28 = arith.constant 0.000000e+00 : f32
    %36 = vector.broadcast %cst_28 : f32 to vector<1x64xf32>
    %37 = vector.extract_strided_slice %27 {offsets = [0, 0], sizes = [8, 64], strides = [1, 1]} : vector<16x64xf32> to vector<8x64xf32>
    %38 = vector.extract_strided_slice %35 {offsets = [0, 0], sizes = [8, 64], strides = [1, 1]} : vector<16x64xf32> to vector<8x64xf32>
    %39 = vector.extract_strided_slice %38 {offsets = [0, 0], sizes = [7, 64], strides = [1, 1]} : vector<8x64xf32> to vector<7x64xf32>
    %40 = tpu.concatenate %36, %39 in 0 : vector<1x64xf32>, vector<7x64xf32> -> vector<8x64xf32>
    %41 = vector.extract_strided_slice %37 {offsets = [1, 0], sizes = [7, 64], strides = [1, 1]} : vector<8x64xf32> to vector<7x64xf32>
    %42 = tpu.concatenate %41, %36 in 0 : vector<7x64xf32>, vector<1x64xf32> -> vector<8x64xf32>
    %43 = vector.extract_strided_slice %27 {offsets = [8, 0], sizes = [8, 64], strides = [1, 1]} : vector<16x64xf32> to vector<8x64xf32>
    %44 = vector.extract_strided_slice %35 {offsets = [8, 0], sizes = [8, 64], strides = [1, 1]} : vector<16x64xf32> to vector<8x64xf32>
    %45 = vector.extract_strided_slice %44 {offsets = [0, 0], sizes = [7, 64], strides = [1, 1]} : vector<8x64xf32> to vector<7x64xf32>
    %46 = tpu.concatenate %36, %45 in 0 : vector<1x64xf32>, vector<7x64xf32> -> vector<8x64xf32>
    %47 = vector.extract_strided_slice %43 {offsets = [1, 0], sizes = [7, 64], strides = [1, 1]} : vector<8x64xf32> to vector<7x64xf32>
    %48 = tpu.concatenate %47, %36 in 0 : vector<7x64xf32>, vector<1x64xf32> -> vector<8x64xf32>
    %49 = tpu.concatenate %40, %46 in 0 : vector<8x64xf32>, vector<8x64xf32> -> vector<16x64xf32>
    %50 = tpu.concatenate %42, %48 in 0 : vector<8x64xf32>, vector<8x64xf32> -> vector<16x64xf32>
    %51 = tpu.concatenate %49, %27, %35, %50 in 1 : vector<16x64xf32>, vector<16x64xf32>, vector<16x64xf32>, vector<16x64xf32> -> vector<16x256xf32>
    %52 = arith.truncf %51 : vector<16x256xf32> to vector<16x256xbf16>
    %cst_29 = arith.constant dense<0.000000e+00> : vector<16x128xf32>
    %53 = tpu.matmul %52, %1, %cst_29 {dimension_numbers = #tpu.dot_dimension_numbers<[1], [0], [0], [1], [0, 0, 1, 1], [], []>} : vector<16x256xbf16>, vector<256x128xbf16>, vector<16x128xf32> -> vector<16x128xf32>
    %c0_30 = arith.constant 0 : index
    %c0_31 = arith.constant 0 : index
    %54 = vector.load %arg5[%c0_30, %c0_31] : memref<1x128xf32, #tpu.memory_space<vmem>>, vector<1x128xf32>
    %55 = vector.broadcast %54 : vector<1x128xf32> to vector<16x128xf32>
    %56 = arith.addf %53, %55 : vector<16x128xf32>
    %cst_32 = arith.constant 0.000000e+00 : f32
    %57 = vector.broadcast %cst_32 : f32 to vector<16x128xf32>
    %58 = arith.cmpf ogt, %56, %57 : vector<16x128xf32>
    %cst_33 = arith.constant 2.000000e-01 : f32
    %59 = vector.broadcast %cst_33 : f32 to vector<16x128xf32>
    %60 = arith.mulf %59, %56 : vector<16x128xf32>
    %61 = arith.select %58, %56, %60 : vector<16x128xi1>, vector<16x128xf32>
    %cst_34 = arith.constant 0.000000e+00 : f32
    %62 = vector.broadcast %cst_34 : f32 to vector<1x128xf32>
    %63 = vector.extract_strided_slice %61 {offsets = [0, 0], sizes = [8, 128], strides = [1, 1]} : vector<16x128xf32> to vector<8x128xf32>
    %64 = tpu.concatenate %62, %63, %62 in 0 : vector<1x128xf32>, vector<8x128xf32>, vector<1x128xf32> -> vector<10x128xf32>
    %65 = vector.extract_strided_slice %64 {offsets = [0, 0], sizes = [7, 128], strides = [1, 1]} : vector<10x128xf32> to vector<7x128xf32>
    %66 = vector.extract_strided_slice %64 {offsets = [1, 0], sizes = [7, 128], strides = [1, 1]} : vector<10x128xf32> to vector<7x128xf32>
    %67 = vector.extract_strided_slice %64 {offsets = [2, 0], sizes = [7, 128], strides = [1, 1]} : vector<10x128xf32> to vector<7x128xf32>
    %68 = vector.extract_strided_slice %64 {offsets = [3, 0], sizes = [7, 128], strides = [1, 1]} : vector<10x128xf32> to vector<7x128xf32>
    %69 = tpu.concatenate %65, %66, %67, %68 in 1 : vector<7x128xf32>, vector<7x128xf32>, vector<7x128xf32>, vector<7x128xf32> -> vector<7x512xf32>
    %70 = vector.extract_strided_slice %61 {offsets = [8, 0], sizes = [8, 128], strides = [1, 1]} : vector<16x128xf32> to vector<8x128xf32>
    %71 = tpu.concatenate %62, %70, %62 in 0 : vector<1x128xf32>, vector<8x128xf32>, vector<1x128xf32> -> vector<10x128xf32>
    %72 = vector.extract_strided_slice %71 {offsets = [0, 0], sizes = [7, 128], strides = [1, 1]} : vector<10x128xf32> to vector<7x128xf32>
    %73 = vector.extract_strided_slice %71 {offsets = [1, 0], sizes = [7, 128], strides = [1, 1]} : vector<10x128xf32> to vector<7x128xf32>
    %74 = vector.extract_strided_slice %71 {offsets = [2, 0], sizes = [7, 128], strides = [1, 1]} : vector<10x128xf32> to vector<7x128xf32>
    %75 = vector.extract_strided_slice %71 {offsets = [3, 0], sizes = [7, 128], strides = [1, 1]} : vector<10x128xf32> to vector<7x128xf32>
    %76 = tpu.concatenate %72, %73, %74, %75 in 1 : vector<7x128xf32>, vector<7x128xf32>, vector<7x128xf32>, vector<7x128xf32> -> vector<7x512xf32>
    %77 = tpu.concatenate %69, %76 in 0 : vector<7x512xf32>, vector<7x512xf32> -> vector<14x512xf32>
    %78 = arith.truncf %77 : vector<14x512xf32> to vector<14x512xbf16>
    %cst_35 = arith.constant dense<0.000000e+00> : vector<14x256xf32>
    %79 = tpu.matmul %78, %2, %cst_35 {dimension_numbers = #tpu.dot_dimension_numbers<[1], [0], [0], [1], [0, 0, 1, 1], [], []>} : vector<14x512xbf16>, vector<512x256xbf16>, vector<14x256xf32> -> vector<14x256xf32>
    %c0_36 = arith.constant 0 : index
    %c0_37 = arith.constant 0 : index
    %80 = vector.load %arg7[%c0_36, %c0_37] : memref<1x256xf32, #tpu.memory_space<vmem>>, vector<1x256xf32>
    %81 = vector.broadcast %80 : vector<1x256xf32> to vector<14x256xf32>
    %82 = arith.addf %79, %81 : vector<14x256xf32>
    %cst_38 = arith.constant 0.000000e+00 : f32
    %83 = vector.broadcast %cst_38 : f32 to vector<14x256xf32>
    %84 = arith.cmpf ogt, %82, %83 : vector<14x256xf32>
    %cst_39 = arith.constant 2.000000e-01 : f32
    %85 = vector.broadcast %cst_39 : f32 to vector<14x256xf32>
    %86 = arith.mulf %85, %82 : vector<14x256xf32>
    %87 = arith.select %84, %82, %86 : vector<14x256xi1>, vector<14x256xf32>
    %c0_40 = arith.constant 0 : index
    %c0_41 = arith.constant 0 : index
    %88 = vector.load %arg8[%c0_40, %c0_41] : memref<1x1024xf32, #tpu.memory_space<vmem>>, vector<1x1024xf32>
    %c0_42 = arith.constant 0 : index
    %c0_43 = arith.constant 0 : index
    %89 = vector.load %arg9[%c0_42, %c0_43] : memref<1x1xf32, #tpu.memory_space<vmem>>, vector<1x1xf32>
    %90 = vector.extract %89[0, 0] : f32 from vector<1x1xf32>
    %91 = vector.extract_strided_slice %87 {offsets = [0, 0], sizes = [7, 256], strides = [1, 1]} : vector<14x256xf32> to vector<7x256xf32>
    %92 = vector.extract_strided_slice %91 {offsets = [0, 0], sizes = [4, 256], strides = [1, 1]} : vector<7x256xf32> to vector<4x256xf32>
    %93 = vector.extract_strided_slice %91 {offsets = [1, 0], sizes = [4, 256], strides = [1, 1]} : vector<7x256xf32> to vector<4x256xf32>
    %94 = vector.extract_strided_slice %91 {offsets = [2, 0], sizes = [4, 256], strides = [1, 1]} : vector<7x256xf32> to vector<4x256xf32>
    %95 = vector.extract_strided_slice %91 {offsets = [3, 0], sizes = [4, 256], strides = [1, 1]} : vector<7x256xf32> to vector<4x256xf32>
    %96 = tpu.concatenate %92, %93, %94, %95 in 1 : vector<4x256xf32>, vector<4x256xf32>, vector<4x256xf32>, vector<4x256xf32> -> vector<4x1024xf32>
    %97 = vector.broadcast %88 : vector<1x1024xf32> to vector<4x1024xf32>
    %98 = arith.mulf %96, %97 : vector<4x1024xf32>
    %cst_44 = arith.constant dense<0.000000e+00> : vector<4xf32>
    %99 = vector.multi_reduction <add>, %98, %cst_44 [1] : vector<4x1024xf32> to vector<4xf32>
    %100 = vector.broadcast %90 : f32 to vector<4xf32>
    %101 = arith.addf %99, %100 : vector<4xf32>
    %102 = vector.extract_strided_slice %87 {offsets = [7, 0], sizes = [7, 256], strides = [1, 1]} : vector<14x256xf32> to vector<7x256xf32>
    %103 = vector.extract_strided_slice %102 {offsets = [0, 0], sizes = [4, 256], strides = [1, 1]} : vector<7x256xf32> to vector<4x256xf32>
    %104 = vector.extract_strided_slice %102 {offsets = [1, 0], sizes = [4, 256], strides = [1, 1]} : vector<7x256xf32> to vector<4x256xf32>
    %105 = vector.extract_strided_slice %102 {offsets = [2, 0], sizes = [4, 256], strides = [1, 1]} : vector<7x256xf32> to vector<4x256xf32>
    %106 = vector.extract_strided_slice %102 {offsets = [3, 0], sizes = [4, 256], strides = [1, 1]} : vector<7x256xf32> to vector<4x256xf32>
    %107 = tpu.concatenate %103, %104, %105, %106 in 1 : vector<4x256xf32>, vector<4x256xf32>, vector<4x256xf32>, vector<4x256xf32> -> vector<4x1024xf32>
    %108 = vector.broadcast %88 : vector<1x1024xf32> to vector<4x1024xf32>
    %109 = arith.mulf %107, %108 : vector<4x1024xf32>
    %cst_45 = arith.constant dense<0.000000e+00> : vector<4xf32>
    %110 = vector.multi_reduction <add>, %109, %cst_45 [1] : vector<4x1024xf32> to vector<4xf32>
    %111 = vector.broadcast %90 : f32 to vector<4xf32>
    %112 = arith.addf %110, %111 : vector<4xf32>
    %113 = vector.shape_cast %101 : vector<4xf32> to vector<1x4xf32>
    %114 = vector.shape_cast %112 : vector<4xf32> to vector<1x4xf32>
    %115 = tpu.concatenate %113, %114 in 0 : vector<1x4xf32>, vector<1x4xf32> -> vector<2x4xf32>
    %116 = vector.shape_cast %115 : vector<2x4xf32> to vector<2x1x4xf32>
    %c0_46 = arith.constant 0 : index
    %c0_47 = arith.constant 0 : index
    %c0_48 = arith.constant 0 : index
    %117 = vector.load %arg10[%c0_46, %c0_47, %c0_48] : memref<2x1x4xf32, #tpu.memory_space<vmem>>, vector<2x1x4xf32>
    tpu.vector_store %arg10[%c0_46, %c0_47, %c0_48], %116 {strides = array<i32>} : memref<2x1x4xf32, #tpu.memory_space<vmem>>, vector<2x1x4xf32>,
    return
  }
  func.func @transform_0(%arg0: i32) -> (i32, i32, i32) {
    %c0_i32 = arith.constant 0 : i32
    %c0_i32_0 = arith.constant 0 : i32
    %c0_i32_1 = arith.constant 0 : i32
    return %arg0, %c0_i32, %c0_i32_0 : i32, i32, i32
  }
  func.func @transform_1(%arg0: i32) -> (i32, i32) {
    %c0_i32 = arith.constant 0 : i32
    %c0_i32_0 = arith.constant 0 : i32
    %c0_i32_1 = arith.constant 0 : i32
    return %c0_i32, %c0_i32_0 : i32, i32
  }
  func.func @transform_2(%arg0: i32) -> (i32, i32) {
    %c0_i32 = arith.constant 0 : i32
    %c0_i32_0 = arith.constant 0 : i32
    %c0_i32_1 = arith.constant 0 : i32
    return %c0_i32, %c0_i32_0 : i32, i32
  }
  func.func @transform_3(%arg0: i32) -> (i32, i32) {
    %c0_i32 = arith.constant 0 : i32
    %c0_i32_0 = arith.constant 0 : i32
    %c0_i32_1 = arith.constant 0 : i32
    return %c0_i32, %c0_i32_0 : i32, i32
  }
  func.func @transform_4(%arg0: i32) -> (i32, i32) {
    %c0_i32 = arith.constant 0 : i32
    %c0_i32_0 = arith.constant 0 : i32
    %c0_i32_1 = arith.constant 0 : i32
    return %c0_i32, %c0_i32_0 : i32, i32
  }
  func.func @transform_5(%arg0: i32) -> (i32, i32) {
    %c0_i32 = arith.constant 0 : i32
    %c0_i32_0 = arith.constant 0 : i32
    %c0_i32_1 = arith.constant 0 : i32
    return %c0_i32, %c0_i32_0 : i32, i32
  }
  func.func @transform_6(%arg0: i32) -> (i32, i32) {
    %c0_i32 = arith.constant 0 : i32
    %c0_i32_0 = arith.constant 0 : i32
    %c0_i32_1 = arith.constant 0 : i32
    return %c0_i32, %c0_i32_0 : i32, i32
  }
  func.func @transform_7(%arg0: i32) -> (i32, i32) {
    %c0_i32 = arith.constant 0 : i32
    %c0_i32_0 = arith.constant 0 : i32
    %c0_i32_1 = arith.constant 0 : i32
    return %c0_i32, %c0_i32_0 : i32, i32
  }
  func.func @transform_8(%arg0: i32) -> (i32, i32) {
    %c0_i32 = arith.constant 0 : i32
    %c0_i32_0 = arith.constant 0 : i32
    %c0_i32_1 = arith.constant 0 : i32
    return %c0_i32, %c0_i32_0 : i32, i32
  }
  func.func @transform_9(%arg0: i32) -> (i32, i32, i32) {
    %c0_i32 = arith.constant 0 : i32
    %c0_i32_0 = arith.constant 0 : i32
    %c0_i32_1 = arith.constant 0 : i32
    return %arg0, %c0_i32, %c0_i32_0 : i32, i32, i32
  }
}

</mosaic_0001>

<llo_original>
// kernel: speech2gesture_d_forward.1
$region0: #{speech2gesture_d_forward.1}
  #allocation0 [shape = 'u32[]', space=smem, size = 0x4, offset = 0x4, fixed_abs, tag = 'smem constant byte address 0x4 - core index']
  #allocation1 [shape = 'u32[144,128]{1,0:T(1,128)}', space=vmem, size = 0x12000, scoped, tag = 'internal scratch']
  #allocation2 [shape = 'f32[1,1]{1,0:T(1,128)S(1)}', space=vmem, size = 0x200, scoped, tag = 'scoped memory for speech2gesture_d_forward.1']
  %s0 = inlined_call_operand.vmem [shape: bf16[4,9,512], index: 0, kind: input, shape index: {}]
  %s1 = inlined_call_operand.vmem [shape: bf16[512,64], index: 1, kind: input, shape index: {}]
  %s2 = inlined_call_operand.vmem [shape: f32[1,64], index: 2, kind: input, shape index: {}]
  %s3 = inlined_call_operand.vmem [shape: bf16[256,128], index: 3, kind: input, shape index: {}]
  %s4 = inlined_call_operand.vmem [shape: f32[1,128], index: 4, kind: input, shape index: {}]
  %s5 = inlined_call_operand.vmem [shape: bf16[512,256], index: 5, kind: input, shape index: {}]
  %s6 = inlined_call_operand.vmem [shape: f32[1,256], index: 6, kind: input, shape index: {}]
  %s7 = inlined_call_operand.vmem [shape: f32[1,1024], index: 7, kind: input, shape index: {}]
  %s8 = inlined_call_operand.<no memory space> [shape: f32[1,1], index: 8, kind: input, shape index: {}]
  %s9 = inlined_call_operand.hbm [shape: f32[4,1,4], index: 9, kind: output, shape index: {}]
  %s10 = sld [smem:[#allocation0]]
  $region69: #{speech2gesture_d_forward.1} parent=0
    _
  %s12 = ssub.s32 1, %s10
  %s13 = scalar_select 0, %s12, %s10
  %v14 = vstv %s8
  %15 = vst [vmem:[#allocation2] sm:$0x1] %v14
  $region1: #{speech2gesture_d_forward.1} parent=0
    #allocation3 [shape = 'u8[2048]{0}', space=vmem, size = 0x800, scoped, tag = 'output window, operand 0']
    #allocation4 [shape = 's32[2]{0}', space=sflag, size = 0x8, scoped, tag = 'scoped memory for speech2gesture_d_forward.1']
    %16 = vsyncpa [#allocation4], 0
    %s17 = scalar_lea.sflag [#allocation4], 1
    %18 = vsyncpa %s17, 0
    loop: start=0, step=1, limit=4
    $region2: #{speech2gesture_d_forward.1} parent=1 // loop_pre_header
      _
    $region3: #{speech2gesture_d_forward.1} parent=1 // loop_header
      %s20 = sphi 0, %s24
      %p21 = scmp.ge.s32.totalorder %s20, 4
      %s30 = sphi 0, %s32
      %s33 = sphi 0, %s30
      %s34 = sphi 0, %s33
      %s50 = sphi 0, %s34
      %s54 = sphi 0, %s54
      %s56 = sphi 0, %s54
      %s57 = sphi 0, %s56
      %s71 = sphi 0, %s57
      %s75 = sphi 0, %s75
      %s77 = sphi 0, %s75
      %s78 = sphi 0, %s77
      %s92 = sphi 0, %s78
      %s96 = sphi 0, %s96
      %s98 = sphi 0, %s96
      %s99 = sphi 0, %s98
      %s113 = sphi 0, %s99
      %s117 = sphi 0, %s117
      %s119 = sphi 0, %s117
      %s120 = sphi 0, %s119
      %s134 = sphi 0, %s120
      %s138 = sphi 0, %s138
      %s140 = sphi 0, %s138
      %s141 = sphi 0, %s140
      %s155 = sphi 0, %s141
      %s159 = sphi 0, %s159
      %s161 = sphi 0, %s159
      %s162 = sphi 0, %s161
      %s176 = sphi 0, %s162
      %s180 = sphi 0, %s180
      %s182 = sphi 0, %s180
      %s183 = sphi 0, %s182
      %s197 = sphi 0, %s183
      %s201 = sphi 0, %s201
      %s203 = sphi 0, %s201
      %s204 = sphi 0, %s203
      %s218 = sphi 0, %s204
      %s224 = sphi 0, %s226
      %s227 = sphi 0, %s224
      %s228 = sphi 0, %s227
      %s244 = sphi 0, %s228
    $region4: #{speech2gesture_d_forward.1} parent=1 // loop_header_branch
      %23 = sbr.rel (%p21) target = $region8
    $region5: #{speech2gesture_d_forward.1} parent=1 // loop_body
      %s25 = ssub.s32 %s20, 1
      %s26 = ssub.s32 %s20, 2
      %s27 = sadd.s32 %s20, 1
      %s28 = ssub.s32 %s20, %s27
      %p29 = scmp.eq.s32.totalorder %s28, 0
      %s31 = sadd.s32 %s30, 1
      %s32 = scalar_select %p29, %s30, %s31
      %p35 = pneg %p29
      %p36 = scmp.eq.s32.totalorder %s20, 1
      %p37 = por %p35, %p36
      %p38 = scmp.ne.s32.totalorder %s30, %s33
      %p39 = scmp.eq.s32.totalorder %s20, 0
      %p40 = por %p38, %p39
      %p41 = scmp.ne.s32.totalorder %s30, %s33
      %p42 = scmp.eq.s32.totalorder %s25, 1
      %p43 = por %p41, %p42
      %p44 = scmp.ne.s32.totalorder %s33, %s34
      %p45 = scmp.eq.s32.totalorder %s25, 0
      %p46 = por %p44, %p45
      %p47 = scmp.ne.s32.totalorder %s33, %s34
      %p48 = scmp.eq.s32.totalorder %s26, 1
      %p49 = por %p47, %p48
      %p51 = scmp.ne.s32.totalorder %s34, %s50
      %p52 = scmp.eq.s32.totalorder %s26, 0
      %p53 = por %p51, %p52
      %s55 = sadd.s32 %s54, 1
      %p58 = scmp.eq.s32.totalorder %s20, 1
      %p59 = scmp.ne.s32.totalorder %s54, %s56
      %p60 = scmp.eq.s32.totalorder %s20, 0
      %p61 = por %p59, %p60
      %p62 = scmp.ne.s32.totalorder %s54, %s56
      %p63 = scmp.eq.s32.totalorder %s25, 1
      %p64 = por %p62, %p63
      %p65 = scmp.ne.s32.totalorder %s56, %s57
      %p66 = scmp.eq.s32.totalorder %s25, 0
      %p67 = por %p65, %p66
      %p68 = scmp.ne.s32.totalorder %s56, %s57
      %p69 = scmp.eq.s32.totalorder %s26, 1
      %p70 = por %p68, %p69
      %p72 = scmp.ne.s32.totalorder %s57, %s71
      %p73 = scmp.eq.s32.totalorder %s26, 0
      %p74 = por %p72, %p73
      %s76 = sadd.s32 %s75, 1
      %p79 = scmp.eq.s32.totalorder %s20, 1
      %p80 = scmp.ne.s32.totalorder %s75, %s77
      %p81 = scmp.eq.s32.totalorder %s20, 0
      %p82 = por %p80, %p81
      %p83 = scmp.ne.s32.totalorder %s75, %s77
      %p84 = scmp.eq.s32.totalorder %s25, 1
      %p85 = por %p83, %p84
      %p86 = scmp.ne.s32.totalorder %s77, %s78
      %p87 = scmp.eq.s32.totalorder %s25, 0
      %p88 = por %p86, %p87
      %p89 = scmp.ne.s32.totalorder %s77, %s78
      %p90 = scmp.eq.s32.totalorder %s26, 1
      %p91 = por %p89, %p90
      %p93 = scmp.ne.s32.totalorder %s78, %s92
      %p94 = scmp.eq.s32.totalorder %s26, 0
      %p95 = por %p93, %p94
      %s97 = sadd.s32 %s96, 1
      %p100 = scmp.eq.s32.totalorder %s20, 1
      %p101 = scmp.ne.s32.totalorder %s96, %s98
      %p102 = scmp.eq.s32.totalorder %s20, 0
      %p103 = por %p101, %p102
      %p104 = scmp.ne.s32.totalorder %s96, %s98
      %p105 = scmp.eq.s32.totalorder %s25, 1
      %p106 = por %p104, %p105
      %p107 = scmp.ne.s32.totalorder %s98, %s99
      %p108 = scmp.eq.s32.totalorder %s25, 0
      %p109 = por %p107, %p108
      %p110 = scmp.ne.s32.totalorder %s98, %s99
      %p111 = scmp.eq.s32.totalorder %s26, 1
      %p112 = por %p110, %p111
      %p114 = scmp.ne.s32.totalorder %s99, %s113
      %p115 = scmp.eq.s32.totalorder %s26, 0
      %p116 = por %p114, %p115
      %s118 = sadd.s32 %s117, 1
      %p121 = scmp.eq.s32.totalorder %s20, 1
      %p122 = scmp.ne.s32.totalorder %s117, %s119
      %p123 = scmp.eq.s32.totalorder %s20, 0
      %p124 = por %p122, %p123
      %p125 = scmp.ne.s32.totalorder %s117, %s119
      %p126 = scmp.eq.s32.totalorder %s25, 1
      %p127 = por %p125, %p126
      %p128 = scmp.ne.s32.totalorder %s119, %s120
      %p129 = scmp.eq.s32.totalorder %s25, 0
      %p130 = por %p128, %p129
      %p131 = scmp.ne.s32.totalorder %s119, %s120
      %p132 = scmp.eq.s32.totalorder %s26, 1
      %p133 = por %p131, %p132
      %p135 = scmp.ne.s32.totalorder %s120, %s134
      %p136 = scmp.eq.s32.totalorder %s26, 0
      %p137 = por %p135, %p136
      %s139 = sadd.s32 %s138, 1
      %p142 = scmp.eq.s32.totalorder %s20, 1
      %p143 = scmp.ne.s32.totalorder %s138, %s140
      %p144 = scmp.eq.s32.totalorder %s20, 0
      %p145 = por %p143, %p144
      %p146 = scmp.ne.s32.totalorder %s138, %s140
      %p147 = scmp.eq.s32.totalorder %s25, 1
      %p148 = por %p146, %p147
      %p149 = scmp.ne.s32.totalorder %s140, %s141
      %p150 = scmp.eq.s32.totalorder %s25, 0
      %p151 = por %p149, %p150
      %p152 = scmp.ne.s32.totalorder %s140, %s141
      %p153 = scmp.eq.s32.totalorder %s26, 1
      %p154 = por %p152, %p153
      %p156 = scmp.ne.s32.totalorder %s141, %s155
      %p157 = scmp.eq.s32.totalorder %s26, 0
      %p158 = por %p156, %p157
      %s160 = sadd.s32 %s159, 1
      %p163 = scmp.eq.s32.totalorder %s20, 1
      %p164 = scmp.ne.s32.totalorder %s159, %s161
      %p165 = scmp.eq.s32.totalorder %s20, 0
      %p166 = por %p164, %p165
      %p167 = scmp.ne.s32.totalorder %s159, %s161
      %p168 = scmp.eq.s32.totalorder %s25, 1
      %p169 = por %p167, %p168
      %p170 = scmp.ne.s32.totalorder %s161, %s162
      %p171 = scmp.eq.s32.totalorder %s25, 0
      %p172 = por %p170, %p171
      %p173 = scmp.ne.s32.totalorder %s161, %s162
      %p174 = scmp.eq.s32.totalorder %s26, 1
      %p175 = por %p173, %p174
      %p177 = scmp.ne.s32.totalorder %s162, %s176
      %p178 = scmp.eq.s32.totalorder %s26, 0
      %p179 = por %p177, %p178
      %s181 = sadd.s32 %s180, 1
      %p184 = scmp.eq.s32.totalorder %s20, 1
      %p185 = scmp.ne.s32.totalorder %s180, %s182
      %p186 = scmp.eq.s32.totalorder %s20, 0
      %p187 = por %p185, %p186
      %p188 = scmp.ne.s32.totalorder %s180, %s182
      %p189 = scmp.eq.s32.totalorder %s25, 1
      %p190 = por %p188, %p189
      %p191 = scmp.ne.s32.totalorder %s182, %s183
      %p192 = scmp.eq.s32.totalorder %s25, 0
      %p193 = por %p191, %p192
      %p194 = scmp.ne.s32.totalorder %s182, %s183
      %p195 = scmp.eq.s32.totalorder %s26, 1
      %p196 = por %p194, %p195
      %p198 = scmp.ne.s32.totalorder %s183, %s197
      %p199 = scmp.eq.s32.totalorder %s26, 0
      %p200 = por %p198, %p199
      %s202 = sadd.s32 %s201, 1
      %p205 = scmp.eq.s32.totalorder %s20, 1
      %p206 = scmp.ne.s32.totalorder %s201, %s203
      %p207 = scmp.eq.s32.totalorder %s20, 0
      %p208 = por %p206, %p207
      %p209 = scmp.ne.s32.totalorder %s201, %s203
      %p210 = scmp.eq.s32.totalorder %s25, 1
      %p211 = por %p209, %p210
      %p212 = scmp.ne.s32.totalorder %s203, %s204
      %p213 = scmp.eq.s32.totalorder %s25, 0
      %p214 = por %p212, %p213
      %p215 = scmp.ne.s32.totalorder %s203, %s204
      %p216 = scmp.eq.s32.totalorder %s26, 1
      %p217 = por %p215, %p216
      %p219 = scmp.ne.s32.totalorder %s204, %s218
      %p220 = scmp.eq.s32.totalorder %s26, 0
      %p221 = por %p219, %p220
      %s222 = ssub.s32 %s20, %s27
      %p223 = scmp.eq.s32.totalorder %s222, 0
      %s225 = sadd.s32 %s224, 1
      %s226 = scalar_select %p223, %s224, %s225
      %p229 = pneg %p223
      %p230 = scmp.eq.s32.totalorder %s20, 1
      %p231 = por %p229, %p230
      %p232 = scmp.ne.s32.totalorder %s224, %s227
      %p233 = scmp.eq.s32.totalorder %s20, 0
      %p234 = por %p232, %p233
      %p235 = scmp.ne.s32.totalorder %s224, %s227
      %p236 = scmp.eq.s32.totalorder %s25, 1
      %p237 = por %p235, %p236
      %p238 = scmp.ne.s32.totalorder %s227, %s228
      %p239 = scmp.eq.s32.totalorder %s25, 0
      %p240 = por %p238, %p239
      %p241 = scmp.ne.s32.totalorder %s227, %s228
      %p242 = scmp.eq.s32.totalorder %s26, 1
      %p243 = por %p241, %p242
      %p245 = scmp.ne.s32.totalorder %s228, %s244
      %p246 = scmp.eq.s32.totalorder %s26, 0
      %p247 = por %p245, %p246
      %p248 = scmp.le.s32.totalorder 1, %s20
      %p249 = scmp.lt.s32.totalorder %s20, 3
      %p250 = pnand %p248, %p249
      %p251 = pneg %p250
      // Predicated region
      $region9: #{speech2gesture_d_forward.1} parent=5 // pred_check
        _
      $region10: #{speech2gesture_d_forward.1} parent=5 // pred_check_branch
        %253 = sbr.rel (%p250) target = $region12
      $region11: #{speech2gesture_d_forward.1} parent=5 // pred_region
        %s254 = ssub.s32 %s20, 1
        // Predicated region
        $region13: #{speech2gesture_d_forward.1} parent=11 // pred_check
          %p255 = pneg %p67
        $region14: #{speech2gesture_d_forward.1} parent=11 // pred_check_branch
          %257 = sbr.rel (%p255) target = $region16
        $region15: #{speech2gesture_d_forward.1} parent=11 // pred_region
          _
        $region16: #{speech2gesture_d_forward.1} parent=11 // pred_fallthru
          _
        // Predicated region
        $region17: #{speech2gesture_d_forward.1} parent=11 // pred_check
          %p258 = pneg %p88
        $region18: #{speech2gesture_d_forward.1} parent=11 // pred_check_branch
          %260 = sbr.rel (%p258) target = $region20
        $region19: #{speech2gesture_d_forward.1} parent=11 // pred_region
          _
        $region20: #{speech2gesture_d_forward.1} parent=11 // pred_fallthru
          _
        // Predicated region
        $region21: #{speech2gesture_d_forward.1} parent=11 // pred_check
          %p261 = pneg %p109
        $region22: #{speech2gesture_d_forward.1} parent=11 // pred_check_branch
          %263 = sbr.rel (%p261) target = $region24
        $region23: #{speech2gesture_d_forward.1} parent=11 // pred_region
          _
        $region24: #{speech2gesture_d_forward.1} parent=11 // pred_fallthru
          _
        // Predicated region
        $region25: #{speech2gesture_d_forward.1} parent=11 // pred_check
          %p264 = pneg %p130
        $region26: #{speech2gesture_d_forward.1} parent=11 // pred_check_branch
          %266 = sbr.rel (%p264) target = $region28
        $region27: #{speech2gesture_d_forward.1} parent=11 // pred_region
          _
        $region28: #{speech2gesture_d_forward.1} parent=11 // pred_fallthru
          _
        // Predicated region
        $region29: #{speech2gesture_d_forward.1} parent=11 // pred_check
          %p267 = pneg %p151
        $region30: #{speech2gesture_d_forward.1} parent=11 // pred_check_branch
          %269 = sbr.rel (%p267) target = $region32
        $region31: #{speech2gesture_d_forward.1} parent=11 // pred_region
          _
        $region32: #{speech2gesture_d_forward.1} parent=11 // pred_fallthru
          _
        // Predicated region
        $region33: #{speech2gesture_d_forward.1} parent=11 // pred_check
          %p270 = pneg %p172
        $region34: #{speech2gesture_d_forward.1} parent=11 // pred_check_branch
          %272 = sbr.rel (%p270) target = $region36
        $region35: #{speech2gesture_d_forward.1} parent=11 // pred_region
          _
        $region36: #{speech2gesture_d_forward.1} parent=11 // pred_fallthru
          _
        // Predicated region
        $region37: #{speech2gesture_d_forward.1} parent=11 // pred_check
          %p273 = pneg %p193
        $region38: #{speech2gesture_d_forward.1} parent=11 // pred_check_branch
          %275 = sbr.rel (%p273) target = $region40
        $region39: #{speech2gesture_d_forward.1} parent=11 // pred_region
          _
        $region40: #{speech2gesture_d_forward.1} parent=11 // pred_fallthru
          _
        // Predicated region
        $region41: #{speech2gesture_d_forward.1} parent=11 // pred_check
          %p276 = pneg %p214
        $region42: #{speech2gesture_d_forward.1} parent=11 // pred_check_branch
          %278 = sbr.rel (%p276) target = $region44
        $region43: #{speech2gesture_d_forward.1} parent=11 // pred_region
          _
        $region44: #{speech2gesture_d_forward.1} parent=11 // pred_fallthru
          _
      $region12: #{speech2gesture_d_forward.1} parent=5 // pred_fallthru
        _
      %p279 = scmp.lt.s32.totalorder %s20, 2
      // Predicated region
      $region45: #{speech2gesture_d_forward.1} parent=5 // pred_check
        %p280 = pneg %p279
      $region46: #{speech2gesture_d_forward.1} parent=5 // pred_check_branch
        %282 = sbr.rel (%p280) target = $region48
      $region47: #{speech2gesture_d_forward.1} parent=5 // pred_region
        // Predicated region
        $region49: #{speech2gesture_d_forward.1} parent=47 // pred_check
          %p283 = pneg %p40
        $region50: #{speech2gesture_d_forward.1} parent=47 // pred_check_branch
          %285 = sbr.rel (%p283) target = $region52
        $region51: #{speech2gesture_d_forward.1} parent=47 // pred_region
          %s286 = smul.u32 2, %s20
          %p287 = scmp.lt.s32.totalorder %s286, 3
          %s288 = scalar_select %p287, %s286, 3
          %s289 = smul.addr %s288, 8
          %s290 = smul.addr %s289, 4
          %s291 = scalar_lea.vmem %s0, %s290
          %s292 = smul.u32 2, %s20
        $region52: #{speech2gesture_d_forward.1} parent=47 // pred_fallthru
          _
      $region48: #{speech2gesture_d_forward.1} parent=5 // pred_fallthru
        _
      %p293 = scmp.le.s32.totalorder 1, %s20
      %p294 = scmp.lt.s32.totalorder %s20, 3
      %p295 = pnand %p293, %p294
      %p296 = pneg %p295
      // Predicated region
      $region53: #{speech2gesture_d_forward.1} parent=5 // pred_check
        _
      $region54: #{speech2gesture_d_forward.1} parent=5 // pred_check_branch
        %298 = sbr.rel (%p295) target = $region56
      $region55: #{speech2gesture_d_forward.1} parent=5 // pred_region
        %s299 = ssub.s32 %s20, 1
        %s300 = smul.u32 2, %s25
        %p301 = scmp.lt.s32.totalorder %s300, 3
        %s302 = scalar_select %p301, %s300, 3
        %s303 = smul.addr %s302, 8
        %s304 = smul.addr %s303, 4
        %s305 = scalar_lea.vmem %s0, %s304
        %p306 = pneg %p46
        %p307 = pneg %p43
        %p308 = pneg %p67
        %p309 = pneg %p64
        %p310 = pneg %p88
        %p311 = pneg %p85
        %p312 = pneg %p109
        %p313 = pneg %p106
        %p314 = pneg %p130
        %p315 = pneg %p127
        %p316 = pneg %p151
        %p317 = pneg %p148
        %p318 = pneg %p172
        %p319 = pneg %p169
        %p320 = pneg %p193
        %p321 = pneg %p190
        %p322 = pneg %p214
        %p323 = pneg %p211
        %p324 = pneg %p240
        %p325 = pneg %p237
        %s326 = sand.u32 %s227, 1
        %s327 = scalar_lea.sflag [#allocation4], %s326
        %s328 = sand.u32 %s227, 1
        %s329 = smul.addr %s328, 2
        %s330 = scalar_lea.vmem [#allocation3], %s329
        %s331 = smul.u32 2, %s25
        %p332 = scmp.lt.s32.totalorder %s331, 3
        %s333 = scalar_select %p332, %s331, 3
        %s334 = smul.addr %s333, 8
        %s335 = smul.addr %s334, 4
        %s336 = scalar_lea.vmem %s0, %s335
        %s337 = smul.u32 2, %s25
        %s338 = smul.u32 2, %s25
        %v340 = vld [vmem:[%s1] sm:$0xf]
        %v341 = vld [vmem:[%s1 + $0x4] sm:$0xf]
        %v342 = vld [vmem:[%s1 + $0x8] sm:$0xf]
        %v343 = vld [vmem:[%s1 + $0xc] sm:$0xf]
        %v344 = vld [vmem:[%s1 + $0x10] sm:$0xf]
        %v345 = vld [vmem:[%s1 + $0x14] sm:$0xf]
        %v346 = vld [vmem:[%s1 + $0x18] sm:$0xf]
        %v347 = vld [vmem:[%s1 + $0x1c] sm:$0xf]
        %v348 = vld [vmem:[%s1 + $0x20] sm:$0xf]
        %v349 = vld [vmem:[%s1 + $0x24] sm:$0xf]
        %v350 = vld [vmem:[%s1 + $0x28] sm:$0xf]
        %v351 = vld [vmem:[%s1 + $0x2c] sm:$0xf]
        %v352 = vld [vmem:[%s1 + $0x30] sm:$0xf]
        %v353 = vld [vmem:[%s1 + $0x34] sm:$0xf]
        %v354 = vld [vmem:[%s1 + $0x38] sm:$0xf]
        %v355 = vld [vmem:[%s1 + $0x3c] sm:$0xf]
        %v356 = vld [vmem:[%s1 + $0x40] sm:$0xf]
        %v357 = vld [vmem:[%s1 + $0x44] sm:$0xf]
        %v358 = vld [vmem:[%s1 + $0x48] sm:$0xf]
        %v359 = vld [vmem:[%s1 + $0x4c] sm:$0xf]
        %v360 = vld [vmem:[%s1 + $0x50] sm:$0xf]
        %v361 = vld [vmem:[%s1 + $0x54] sm:$0xf]
        %v362 = vld [vmem:[%s1 + $0x58] sm:$0xf]
        %v363 = vld [vmem:[%s1 + $0x5c] sm:$0xf]
        %v364 = vld [vmem:[%s1 + $0x60] sm:$0xf]
        %v365 = vld [vmem:[%s1 + $0x64] sm:$0xf]
        %v366 = vld [vmem:[%s1 + $0x68] sm:$0xf]
        %v367 = vld [vmem:[%s1 + $0x6c] sm:$0xf]
        %v368 = vld [vmem:[%s1 + $0x70] sm:$0xf]
        %v369 = vld [vmem:[%s1 + $0x74] sm:$0xf]
        %v370 = vld [vmem:[%s1 + $0x78] sm:$0xf]
        %v371 = vld [vmem:[%s1 + $0x7c] sm:$0xf]
        %v372 = vld [vmem:[%s1 + $0x80] sm:$0xf]
        %v373 = vld [vmem:[%s1 + $0x84] sm:$0xf]
        %v374 = vld [vmem:[%s1 + $0x88] sm:$0xf]
        %v375 = vld [vmem:[%s1 + $0x8c] sm:$0xf]
        %v376 = vld [vmem:[%s1 + $0x90] sm:$0xf]
        %v377 = vld [vmem:[%s1 + $0x94] sm:$0xf]
        %v378 = vld [vmem:[%s1 + $0x98] sm:$0xf]
        %v379 = vld [vmem:[%s1 + $0x9c] sm:$0xf]
        %v380 = vld [vmem:[%s1 + $0xa0] sm:$0xf]
        %v381 = vld [vmem:[%s1 + $0xa4] sm:$0xf]
        %v382 = vld [vmem:[%s1 + $0xa8] sm:$0xf]
        %v383 = vld [vmem:[%s1 + $0xac] sm:$0xf]
        %v384 = vld [vmem:[%s1 + $0xb0] sm:$0xf]
        %v385 = vld [vmem:[%s1 + $0xb4] sm:$0xf]
        %v386 = vld [vmem:[%s1 + $0xb8] sm:$0xf]
        %v387 = vld [vmem:[%s1 + $0xbc] sm:$0xf]
        %v388 = vld [vmem:[%s1 + $0xc0] sm:$0xf]
        %v389 = vld [vmem:[%s1 + $0xc4] sm:$0xf]
        %v390 = vld [vmem:[%s1 + $0xc8] sm:$0xf]
        %v391 = vld [vmem:[%s1 + $0xcc] sm:$0xf]
        %v392 = vld [vmem:[%s1 + $0xd0] sm:$0xf]
        %v393 = vld [vmem:[%s1 + $0xd4] sm:$0xf]
        %v394 = vld [vmem:[%s1 + $0xd8] sm:$0xf]
        %v395 = vld [vmem:[%s1 + $0xdc] sm:$0xf]
        %v396 = vld [vmem:[%s1 + $0xe0] sm:$0xf]
        %v397 = vld [vmem:[%s1 + $0xe4] sm:$0xf]
        %v398 = vld [vmem:[%s1 + $0xe8] sm:$0xf]
        %v399 = vld [vmem:[%s1 + $0xec] sm:$0xf]
        %v400 = vld [vmem:[%s1 + $0xf0] sm:$0xf]
        %v401 = vld [vmem:[%s1 + $0xf4] sm:$0xf]
        %v402 = vld [vmem:[%s1 + $0xf8] sm:$0xf]
        %v403 = vld [vmem:[%s1 + $0xfc] sm:$0xf]
        %v404 = vld [vmem:[%s3] sm:$0xf]
        %v405 = vld [vmem:[%s3 + $0x4] sm:$0xf]
        %v406 = vld [vmem:[%s3 + $0x8] sm:$0xf]
        %v407 = vld [vmem:[%s3 + $0xc] sm:$0xf]
        %v408 = vld [vmem:[%s3 + $0x10] sm:$0xf]
        %v409 = vld [vmem:[%s3 + $0x14] sm:$0xf]
        %v410 = vld [vmem:[%s3 + $0x18] sm:$0xf]
        %v411 = vld [vmem:[%s3 + $0x1c] sm:$0xf]
        %v412 = vld [vmem:[%s3 + $0x20] sm:$0xf]
        %v413 = vld [vmem:[%s3 + $0x24] sm:$0xf]
        %v414 = vld [vmem:[%s3 + $0x28] sm:$0xf]
        %v415 = vld [vmem:[%s3 + $0x2c] sm:$0xf]
        %v416 = vld [vmem:[%s3 + $0x30] sm:$0xf]
        %v417 = vld [vmem:[%s3 + $0x34] sm:$0xf]
        %v418 = vld [vmem:[%s3 + $0x38] sm:$0xf]
        %v419 = vld [vmem:[%s3 + $0x3c] sm:$0xf]
        %v420 = vld [vmem:[%s3 + $0x40] sm:$0xf]
        %v421 = vld [vmem:[%s3 + $0x44] sm:$0xf]
        %v422 = vld [vmem:[%s3 + $0x48] sm:$0xf]
        %v423 = vld [vmem:[%s3 + $0x4c] sm:$0xf]
        %v424 = vld [vmem:[%s3 + $0x50] sm:$0xf]
        %v425 = vld [vmem:[%s3 + $0x54] sm:$0xf]
        %v426 = vld [vmem:[%s3 + $0x58] sm:$0xf]
        %v427 = vld [vmem:[%s3 + $0x5c] sm:$0xf]
        %v428 = vld [vmem:[%s3 + $0x60] sm:$0xf]
        %v429 = vld [vmem:[%s3 + $0x64] sm:$0xf]
        %v430 = vld [vmem:[%s3 + $0x68] sm:$0xf]
        %v431 = vld [vmem:[%s3 + $0x6c] sm:$0xf]
        %v432 = vld [vmem:[%s3 + $0x70] sm:$0xf]
        %v433 = vld [vmem:[%s3 + $0x74] sm:$0xf]
        %v434 = vld [vmem:[%s3 + $0x78] sm:$0xf]
        %v435 = vld [vmem:[%s3 + $0x7c] sm:$0xf]
        %v436 = vld [vmem:[%s5] sm:$0xff]
        %v437 = vld [vmem:[%s5 + $0x8] sm:$0xff]
        %v438 = vld [vmem:[%s5 + $0x10] sm:$0xff]
        %v439 = vld [vmem:[%s5 + $0x18] sm:$0xff]
        %v440 = vld [vmem:[%s5 + $0x20] sm:$0xff]
        %v441 = vld [vmem:[%s5 + $0x28] sm:$0xff]
        %v442 = vld [vmem:[%s5 + $0x30] sm:$0xff]
        %v443 = vld [vmem:[%s5 + $0x38] sm:$0xff]
        %v444 = vld [vmem:[%s5 + $0x40] sm:$0xff]
        %v445 = vld [vmem:[%s5 + $0x48] sm:$0xff]
        %v446 = vld [vmem:[%s5 + $0x50] sm:$0xff]
        %v447 = vld [vmem:[%s5 + $0x58] sm:$0xff]
        %v448 = vld [vmem:[%s5 + $0x60] sm:$0xff]
        %v449 = vld [vmem:[%s5 + $0x68] sm:$0xff]
        %v450 = vld [vmem:[%s5 + $0x70] sm:$0xff]
        %v451 = vld [vmem:[%s5 + $0x78] sm:$0xff]
        %v452 = vld [vmem:[%s5 + $0x80] sm:$0xff]
        %v453 = vld [vmem:[%s5 + $0x88] sm:$0xff]
        %v454 = vld [vmem:[%s5 + $0x90] sm:$0xff]
        %v455 = vld [vmem:[%s5 + $0x98] sm:$0xff]
        %v456 = vld [vmem:[%s5 + $0xa0] sm:$0xff]
        %v457 = vld [vmem:[%s5 + $0xa8] sm:$0xff]
        %v458 = vld [vmem:[%s5 + $0xb0] sm:$0xff]
        %v459 = vld [vmem:[%s5 + $0xb8] sm:$0xff]
        %v460 = vld [vmem:[%s5 + $0xc0] sm:$0xff]
        %v461 = vld [vmem:[%s5 + $0xc8] sm:$0xff]
        %v462 = vld [vmem:[%s5 + $0xd0] sm:$0xff]
        %v463 = vld [vmem:[%s5 + $0xd8] sm:$0xff]
        %v464 = vld [vmem:[%s5 + $0xe0] sm:$0xff]
        %v465 = vld [vmem:[%s5 + $0xe8] sm:$0xff]
        %v466 = vld [vmem:[%s5 + $0xf0] sm:$0xff]
        %v467 = vld [vmem:[%s5 + $0xf8] sm:$0xff]
        %v468 = vld [vmem:[%s5 + $0x100] sm:$0xff]
        %v469 = vld [vmem:[%s5 + $0x108] sm:$0xff]
        %v470 = vld [vmem:[%s5 + $0x110] sm:$0xff]
        %v471 = vld [vmem:[%s5 + $0x118] sm:$0xff]
        %v472 = vld [vmem:[%s5 + $0x120] sm:$0xff]
        %v473 = vld [vmem:[%s5 + $0x128] sm:$0xff]
        %v474 = vld [vmem:[%s5 + $0x130] sm:$0xff]
        %v475 = vld [vmem:[%s5 + $0x138] sm:$0xff]
        %v476 = vld [vmem:[%s5 + $0x140] sm:$0xff]
        %v477 = vld [vmem:[%s5 + $0x148] sm:$0xff]
        %v478 = vld [vmem:[%s5 + $0x150] sm:$0xff]
        %v479 = vld [vmem:[%s5 + $0x158] sm:$0xff]
        %v480 = vld [vmem:[%s5 + $0x160] sm:$0xff]
        %v481 = vld [vmem:[%s5 + $0x168] sm:$0xff]
        %v482 = vld [vmem:[%s5 + $0x170] sm:$0xff]
        %v483 = vld [vmem:[%s5 + $0x178] sm:$0xff]
        %v484 = vld [vmem:[%s5 + $0x180] sm:$0xff]
        %v485 = vld [vmem:[%s5 + $0x188] sm:$0xff]
        %v486 = vld [vmem:[%s5 + $0x190] sm:$0xff]
        %v487 = vld [vmem:[%s5 + $0x198] sm:$0xff]
        %v488 = vld [vmem:[%s5 + $0x1a0] sm:$0xff]
        %v489 = vld [vmem:[%s5 + $0x1a8] sm:$0xff]
        %v490 = vld [vmem:[%s5 + $0x1b0] sm:$0xff]
        %v491 = vld [vmem:[%s5 + $0x1b8] sm:$0xff]
        %v492 = vld [vmem:[%s5 + $0x1c0] sm:$0xff]
        %v493 = vld [vmem:[%s5 + $0x1c8] sm:$0xff]
        %v494 = vld [vmem:[%s5 + $0x1d0] sm:$0xff]
        %v495 = vld [vmem:[%s5 + $0x1d8] sm:$0xff]
        %v496 = vld [vmem:[%s5 + $0x1e0] sm:$0xff]
        %v497 = vld [vmem:[%s5 + $0x1e8] sm:$0xff]
        %v498 = vld [vmem:[%s5 + $0x1f0] sm:$0xff]
        %v499 = vld [vmem:[%s5 + $0x1f8] sm:$0xff]
        %v500 = vld [vmem:[%s2] sm:$0x1]
        %v501 = vld [vmem:[%s336] sm:$0xff]
        %v502 = vld [vmem:[%s336 + $0x8] sm:$0xff]
        %s503 = scalar_lea.vmem %s336, 32
        %v504 = vld [vmem:[%s503] sm:$0xff]
        %v505 = vld [vmem:[%s503 + $0x8] sm:$0xff]
        %v508 = vunpack.c.l.b16 %v501
        %v509 = vunpack.c.h.b16 %v501
        %v510 = vunpack.c.l.b16 %v502
        %v511 = vunpack.c.h.b16 %v502
        %v512 = vpack.c.b16 %v508, %v508
        %v513 = vpack.c.b16 %v509, %v509
        %v514 = vpack.c.b16 %v510, %v510
        %v515 = vpack.c.b16 %v511, %v511
        %v518 = vunpack.c.l.b16 %v504
        %v519 = vunpack.c.h.b16 %v504
        %v520 = vunpack.c.l.b16 %v505
        %v521 = vunpack.c.h.b16 %v505
        %v522 = vpack.c.b16 %v518, %v518
        %v523 = vpack.c.b16 %v519, %v519
        %v524 = vpack.c.b16 %v520, %v520
        %v525 = vpack.c.b16 %v521, %v521
        %vm526 = vcmask 1043456
        %v529 = vsel %vm526, %v512, %v522
        %v533 = vsel %vm526, %v513, %v523
        %v537 = vsel %vm526, %v514, %v524
        %v541 = vsel %vm526, %v515, %v525
        %v543 = vld [vmem:[%s336 + $0x10] sm:$0x11]
        %v545 = vunpack.c.l.b16 %v543
        %v546 = vunpack.c.h.b16 %v543
        %v547 = vpack.c.b16 %v545, %v508
        %v548 = vpack.c.b16 %v546, %v509
        %v550 = vshrl.u32 %v547, 16
        %v552 = vshll.u32 %v547, 16
        %v554 = vrot.slane %v552, 1
        %v555 = vor.u32 %v550, %v554
        %v557 = vshrl.u32 %v548, 16
        %v559 = vshll.u32 %v548, 16
        %v561 = vrot.slane %v559, 1
        %v562 = vor.u32 %v557, %v561
        %v563 = vld [vmem:[%s503 + $0x10] sm:$0x11]
        %v565 = vunpack.c.l.b16 %v563
        %v566 = vunpack.c.h.b16 %v563
        %v567 = vpack.c.b16 %v565, %v518
        %v568 = vpack.c.b16 %v566, %v519
        %v570 = vshrl.u32 %v567, 16
        %v572 = vshll.u32 %v567, 16
        %v574 = vrot.slane %v572, 1
        %v575 = vor.u32 %v570, %v574
        %v577 = vshrl.u32 %v568, 16
        %v579 = vshll.u32 %v568, 16
        %v581 = vrot.slane %v579, 1
        %v582 = vor.u32 %v577, %v581
        %v583 = vrot.slane %v524, 4
        %v584 = vrot.slane %v525, 4
        %v585 = vrot.slane %v575, 4
        %v586 = vrot.slane %v582, 4
        %v588 = vsel %vm526, %v514, %v583
        %v591 = vsel %vm526, %v515, %v584
        %v595 = vsel %vm526, %v555, %v585
        %v599 = vsel %vm526, %v562, %v586
        %v602 = vlaneseq
        %v603 = vshrl.u32 %v602, 7
        %v604 = vsub.s32 0, %v603
        %v605 = vrot.slane %v500, %v604
        %v671 = vunpack.c.l.b16 %v340
        %v672 = vunpack.c.l.b16 %v341
        %v673 = vunpack.c.l.b16 %v342
        %v674 = vunpack.c.l.b16 %v343
        %v675 = vunpack.c.l.b16 %v344
        %v676 = vunpack.c.l.b16 %v345
        %v677 = vunpack.c.l.b16 %v346
        %v678 = vunpack.c.l.b16 %v347
        %v679 = vunpack.c.l.b16 %v348
        %v680 = vunpack.c.l.b16 %v349
        %v681 = vunpack.c.l.b16 %v350
        %v682 = vunpack.c.l.b16 %v351
        %v683 = vunpack.c.l.b16 %v352
        %v684 = vunpack.c.l.b16 %v353
        %v685 = vunpack.c.l.b16 %v354
        %v686 = vunpack.c.l.b16 %v355
        %v687 = vunpack.c.l.b16 %v356
        %v688 = vunpack.c.l.b16 %v357
        %v689 = vunpack.c.l.b16 %v358
        %v690 = vunpack.c.l.b16 %v359
        %v691 = vunpack.c.l.b16 %v360
        %v692 = vunpack.c.l.b16 %v361
        %v693 = vunpack.c.l.b16 %v362
        %v694 = vunpack.c.l.b16 %v363
        %v695 = vunpack.c.l.b16 %v364
        %v696 = vunpack.c.l.b16 %v365
        %v697 = vunpack.c.l.b16 %v366
        %v698 = vunpack.c.l.b16 %v367
        %v699 = vunpack.c.l.b16 %v368
        %v700 = vunpack.c.l.b16 %v369
        %v701 = vunpack.c.l.b16 %v370
        %v702 = vunpack.c.l.b16 %v371
        %v703 = vunpack.c.l.b16 %v372
        %v704 = vunpack.c.l.b16 %v373
        %v705 = vunpack.c.l.b16 %v374
        %v706 = vunpack.c.l.b16 %v375
        %v707 = vunpack.c.l.b16 %v376
        %v708 = vunpack.c.l.b16 %v377
        %v709 = vunpack.c.l.b16 %v378
        %v710 = vunpack.c.l.b16 %v379
        %v711 = vunpack.c.l.b16 %v380
        %v712 = vunpack.c.l.b16 %v381
        %v713 = vunpack.c.l.b16 %v382
        %v714 = vunpack.c.l.b16 %v383
        %v715 = vunpack.c.l.b16 %v384
        %v716 = vunpack.c.l.b16 %v385
        %v717 = vunpack.c.l.b16 %v386
        %v718 = vunpack.c.l.b16 %v387
        %v719 = vunpack.c.l.b16 %v388
        %v720 = vunpack.c.l.b16 %v389
        %v721 = vunpack.c.l.b16 %v390
        %v722 = vunpack.c.l.b16 %v391
        %v723 = vunpack.c.l.b16 %v392
        %v724 = vunpack.c.l.b16 %v393
        %v725 = vunpack.c.l.b16 %v394
        %v726 = vunpack.c.l.b16 %v395
        %v727 = vunpack.c.l.b16 %v396
        %v728 = vunpack.c.l.b16 %v397
        %v729 = vunpack.c.l.b16 %v398
        %v730 = vunpack.c.l.b16 %v399
        %v731 = vunpack.c.l.b16 %v400
        %v732 = vunpack.c.l.b16 %v401
        %v733 = vunpack.c.l.b16 %v402
        %v734 = vunpack.c.l.b16 %v403
        %v735 = vpack.c.b16 %v672, %v671
        %v736 = vpack.c.b16 %v674, %v673
        %v737 = vpack.c.b16 %v676, %v675
        %v738 = vpack.c.b16 %v678, %v677
        %v739 = vpack.c.b16 %v680, %v679
        %v740 = vpack.c.b16 %v682, %v681
        %v741 = vpack.c.b16 %v684, %v683
        %v742 = vpack.c.b16 %v686, %v685
        %v743 = vpack.c.b16 %v688, %v687
        %v744 = vpack.c.b16 %v690, %v689
        %v745 = vpack.c.b16 %v692, %v691
        %v746 = vpack.c.b16 %v694, %v693
        %v747 = vpack.c.b16 %v696, %v695
        %v748 = vpack.c.b16 %v698, %v697
        %v749 = vpack.c.b16 %v700, %v699
        %v750 = vpack.c.b16 %v702, %v701
        %v751 = vpack.c.b16 %v704, %v703
        %v752 = vpack.c.b16 %v706, %v705
        %v753 = vpack.c.b16 %v708, %v707
        %v754 = vpack.c.b16 %v710, %v709
        %v755 = vpack.c.b16 %v712, %v711
        %v756 = vpack.c.b16 %v714, %v713
        %v757 = vpack.c.b16 %v716, %v715
        %v758 = vpack.c.b16 %v718, %v717
        %v759 = vpack.c.b16 %v720, %v719
        %v760 = vpack.c.b16 %v722, %v721
        %v761 = vpack.c.b16 %v724, %v723
        %v762 = vpack.c.b16 %v726, %v725
        %v763 = vpack.c.b16 %v728, %v727
        %v764 = vpack.c.b16 %v730, %v729
        %v765 = vpack.c.b16 %v732, %v731
        %v766 = vpack.c.b16 %v734, %v733
        %799 = vmatprep.subr.bf16.mxu0 0
        %800 = vmatpush1.bf16.msra.mxu0 %v735
        %801 = vmatprep.subr.bf16.mxu0 0
        %802 = vmatpush1.bf16.msra.mxu0 %v736
        %803 = vmatprep.subr.bf16.mxu0 0
        %804 = vmatpush1.bf16.msra.mxu0 %v737
        %805 = vmatprep.subr.bf16.mxu0 0
        %806 = vmatpush1.bf16.msra.mxu0 %v738
        %807 = vmatprep.subr.bf16.mxu0 0
        %808 = vmatpush1.bf16.msra.mxu0 %v739
        %809 = vmatprep.subr.bf16.mxu0 0
        %810 = vmatpush1.bf16.msra.mxu0 %v740
        %811 = vmatprep.subr.bf16.mxu0 0
        %812 = vmatpush1.bf16.msra.mxu0 %v741
        %813 = vmatprep.subr.bf16.mxu0 0
        %814 = vmatpush1.bf16.msra.mxu0 %v742
        %815 = vmatprep.subr.bf16.mxu0 0
        %816 = vmatpush1.bf16.msra.mxu0 %v743
        %817 = vmatprep.subr.bf16.mxu0 0
        %818 = vmatpush1.bf16.msra.mxu0 %v744
        %819 = vmatprep.subr.bf16.mxu0 0
        %820 = vmatpush1.bf16.msra.mxu0 %v745
        %821 = vmatprep.subr.bf16.mxu0 0
        %822 = vmatpush1.bf16.msra.mxu0 %v746
        %823 = vmatprep.subr.bf16.mxu0 0
        %824 = vmatpush1.bf16.msra.mxu0 %v747
        %825 = vmatprep.subr.bf16.mxu0 0
        %826 = vmatpush1.bf16.msra.mxu0 %v748
        %827 = vmatprep.subr.bf16.mxu0 0
        %828 = vmatpush1.bf16.msra.mxu0 %v749
        %829 = vmatprep.subr.bf16.mxu0 0
        %830 = vmatpush1.bf16.msra.mxu0 %v750
        %831 = vmatprep.mubr.bf16.mxu0 %v533
        %832 = vmatmul.mubr.bf16.gmra.mrb[0].mxu0 %v529
        %v833 = vpop.f32.mrb[0].mxu0
        %v834 = vadd.f32 %v605, %v833
        %v835 = vpop.f32.mrb[0].mxu0
        %v836 = vpop.f32.mrb[0].mxu0
        %v837 = vadd.f32 %v605, %v836
        %v838 = vpop.f32.mrb[0].mxu0
        %839 = vdwg.mxu0
        %840 = vmatprep.subr.bf16.mxu0 0
        %841 = vmatpush1.bf16.msra.mxu0 %v751
        %842 = vmatprep.subr.bf16.mxu0 0
        %843 = vmatpush1.bf16.msra.mxu0 %v752
        %844 = vmatprep.subr.bf16.mxu0 0
        %845 = vmatpush1.bf16.msra.mxu0 %v753
        %846 = vmatprep.subr.bf16.mxu0 0
        %847 = vmatpush1.bf16.msra.mxu0 %v754
        %848 = vmatprep.subr.bf16.mxu0 0
        %849 = vmatpush1.bf16.msra.mxu0 %v755
        %850 = vmatprep.subr.bf16.mxu0 0
        %851 = vmatpush1.bf16.msra.mxu0 %v756
        %852 = vmatprep.subr.bf16.mxu0 0
        %853 = vmatpush1.bf16.msra.mxu0 %v757
        %854 = vmatprep.subr.bf16.mxu0 0
        %855 = vmatpush1.bf16.msra.mxu0 %v758
        %856 = vmatprep.subr.bf16.mxu0 0
        %857 = vmatpush1.bf16.msra.mxu0 %v759
        %858 = vmatprep.subr.bf16.mxu0 0
        %859 = vmatpush1.bf16.msra.mxu0 %v760
        %860 = vmatprep.subr.bf16.mxu0 0
        %861 = vmatpush1.bf16.msra.mxu0 %v761
        %862 = vmatprep.subr.bf16.mxu0 0
        %863 = vmatpush1.bf16.msra.mxu0 %v762
        %864 = vmatprep.subr.bf16.mxu0 0
        %865 = vmatpush1.bf16.msra.mxu0 %v763
        %866 = vmatprep.subr.bf16.mxu0 0
        %867 = vmatpush1.bf16.msra.mxu0 %v764
        %868 = vmatprep.subr.bf16.mxu0 0
        %869 = vmatpush1.bf16.msra.mxu0 %v765
        %870 = vmatprep.subr.bf16.mxu0 0
        %871 = vmatpush1.bf16.msra.mxu0 %v766
        %872 = vmatprep.mubr.bf16.mxu0 %v541
        %873 = vmatmul.mubr.bf16.gmra.mrb[0].mxu0 %v537
        %v874 = vpop.f32.mrb[0].mxu0
        %v875 = vadd.f32 %v834, %v874
        %v876 = vpop.f32.mrb[0].mxu0
        %v877 = vpop.f32.mrb[0].mxu0
        %v878 = vadd.f32 %v837, %v877
        %v879 = vpop.f32.mrb[0].mxu0
        %880 = vdwg.mxu0
        %vm881 = vcmp.gt.f32.partialorder %v875, 0.0
        %vm882 = vcmp.gt.f32.partialorder %v878, 0.0
        %v883 = vmul.f32 %v875, 0.2
        %v884 = vmul.f32 %v878, 0.2
        %v885 = vsel %vm881, %v875, %v883
        %v886 = vsel %vm882, %v878, %v884
        %887 = vmatprep.subr.bf16.mxu0 0
        %888 = vmatpush1.bf16.msra.mxu0 %v735
        %889 = vmatprep.subr.bf16.mxu0 0
        %890 = vmatpush1.bf16.msra.mxu0 %v736
        %891 = vmatprep.subr.bf16.mxu0 0
        %892 = vmatpush1.bf16.msra.mxu0 %v737
        %893 = vmatprep.subr.bf16.mxu0 0
        %894 = vmatpush1.bf16.msra.mxu0 %v738
        %895 = vmatprep.subr.bf16.mxu0 0
        %896 = vmatpush1.bf16.msra.mxu0 %v739
        %897 = vmatprep.subr.bf16.mxu0 0
        %898 = vmatpush1.bf16.msra.mxu0 %v740
        %899 = vmatprep.subr.bf16.mxu0 0
        %900 = vmatpush1.bf16.msra.mxu0 %v741
        %901 = vmatprep.subr.bf16.mxu0 0
        %902 = vmatpush1.bf16.msra.mxu0 %v742
        %903 = vmatprep.subr.bf16.mxu0 0
        %904 = vmatpush1.bf16.msra.mxu0 %v743
        %905 = vmatprep.subr.bf16.mxu0 0
        %906 = vmatpush1.bf16.msra.mxu0 %v744
        %907 = vmatprep.subr.bf16.mxu0 0
        %908 = vmatpush1.bf16.msra.mxu0 %v745
        %909 = vmatprep.subr.bf16.mxu0 0
        %910 = vmatpush1.bf16.msra.mxu0 %v746
        %911 = vmatprep.subr.bf16.mxu0 0
        %912 = vmatpush1.bf16.msra.mxu0 %v747
        %913 = vmatprep.subr.bf16.mxu0 0
        %914 = vmatpush1.bf16.msra.mxu0 %v748
        %915 = vmatprep.subr.bf16.mxu0 0
        %916 = vmatpush1.bf16.msra.mxu0 %v749
        %917 = vmatprep.subr.bf16.mxu0 0
        %918 = vmatpush1.bf16.msra.mxu0 %v750
        %919 = vmatprep.mubr.bf16.mxu0 %v591
        %920 = vmatmul.mubr.bf16.gmra.mrb[0].mxu0 %v588
        %v921 = vpop.f32.mrb[0].mxu0
        %v922 = vadd.f32 %v605, %v921
        %v923 = vpop.f32.mrb[0].mxu0
        %v924 = vpop.f32.mrb[0].mxu0
        %v925 = vadd.f32 %v605, %v924
        %v926 = vpop.f32.mrb[0].mxu0
        %927 = vdwg.mxu0
        %928 = vmatprep.subr.bf16.mxu0 0
        %929 = vmatpush1.bf16.msra.mxu0 %v751
        %930 = vmatprep.subr.bf16.mxu0 0
        %931 = vmatpush1.bf16.msra.mxu0 %v752
        %932 = vmatprep.subr.bf16.mxu0 0
        %933 = vmatpush1.bf16.msra.mxu0 %v753
        %934 = vmatprep.subr.bf16.mxu0 0
        %935 = vmatpush1.bf16.msra.mxu0 %v754
        %936 = vmatprep.subr.bf16.mxu0 0
        %937 = vmatpush1.bf16.msra.mxu0 %v755
        %938 = vmatprep.subr.bf16.mxu0 0
        %939 = vmatpush1.bf16.msra.mxu0 %v756
        %940 = vmatprep.subr.bf16.mxu0 0
        %941 = vmatpush1.bf16.msra.mxu0 %v757
        %942 = vmatprep.subr.bf16.mxu0 0
        %943 = vmatpush1.bf16.msra.mxu0 %v758
        %944 = vmatprep.subr.bf16.mxu0 0
        %945 = vmatpush1.bf16.msra.mxu0 %v759
        %946 = vmatprep.subr.bf16.mxu0 0
        %947 = vmatpush1.bf16.msra.mxu0 %v760
        %948 = vmatprep.subr.bf16.mxu0 0
        %949 = vmatpush1.bf16.msra.mxu0 %v761
        %950 = vmatprep.subr.bf16.mxu0 0
        %951 = vmatpush1.bf16.msra.mxu0 %v762
        %952 = vmatprep.subr.bf16.mxu0 0
        %953 = vmatpush1.bf16.msra.mxu0 %v763
        %954 = vmatprep.subr.bf16.mxu0 0
        %955 = vmatpush1.bf16.msra.mxu0 %v764
        %956 = vmatprep.subr.bf16.mxu0 0
        %957 = vmatpush1.bf16.msra.mxu0 %v765
        %958 = vmatprep.subr.bf16.mxu0 0
        %959 = vmatpush1.bf16.msra.mxu0 %v766
        %960 = vmatprep.mubr.bf16.mxu0 %v599
        %961 = vmatmul.mubr.bf16.gmra.mrb[0].mxu0 %v595
        %v962 = vpop.f32.mrb[0].mxu0
        %v963 = vadd.f32 %v922, %v962
        %v964 = vpop.f32.mrb[0].mxu0
        %v965 = vpop.f32.mrb[0].mxu0
        %v966 = vadd.f32 %v925, %v965
        %v967 = vpop.f32.mrb[0].mxu0
        %968 = vdwg.mxu0
        %vm969 = vcmp.gt.f32.partialorder %v963, 0.0
        %vm970 = vcmp.gt.f32.partialorder %v966, 0.0
        %v971 = vmul.f32 %v963, 0.2
        %v972 = vmul.f32 %v966, 0.2
        %v973 = vsel %vm969, %v963, %v971
        %v974 = vsel %vm970, %v966, %v972
        %v976 = vrot.slane %v973, 7
        %vm978 = vcmask 1040384
        %v979 = vsel %vm978, 0.0, %v976
        %v981 = vrot.slane %v885, 1
        %vm983 = vcmask 1046528
        %v984 = vsel %vm983, %v981, 0.0
        %v986 = vrot.slane %v974, 7
        %v988 = vsel %vm978, 0.0, %v986
        %v990 = vrot.slane %v886, 1
        %v992 = vsel %vm983, %v990, 0.0
        %993 = vrot.lane.b32.xlu0 %v885, 64
        %v994 = vpop.permute.xlu0 %993
        %995 = vrot.lane.b32.xlu0 %v886, 64
        %v996 = vpop.permute.xlu0 %995
        %1001 = vrot.lane.b32.xlu0 %v984, 64
        %v1002 = vpop.permute.xlu0 %1001
        %1003 = vrot.lane.b32.xlu0 %v992, 64
        %v1004 = vpop.permute.xlu0 %1003
        %vm1007 = vcmask 523264
        %v1008 = vsel %vm1007, %v979, %v994
        %v1009 = vsel %vm1007, %v988, %v996
        %v1010 = vsel %vm1007, %v973, %v1002
        %v1011 = vsel %vm1007, %v974, %v1004
        %v1012 = vpack.c.bf16 %v1009, %v1008
        %v1013 = vpack.c.bf16 %v1011, %v1010
        %v1014 = vld [vmem:[%s4] sm:$0x1]
        %v1016 = vlaneseq
        %v1017 = vshrl.u32 %v1016, 7
        %v1018 = vsub.s32 0, %v1017
        %v1019 = vrot.slane %v1014, %v1018
        %v1053 = vunpack.c.l.b16 %v404
        %v1054 = vunpack.c.l.b16 %v405
        %v1055 = vunpack.c.l.b16 %v406
        %v1056 = vunpack.c.l.b16 %v407
        %v1057 = vunpack.c.l.b16 %v408
        %v1058 = vunpack.c.l.b16 %v409
        %v1059 = vunpack.c.l.b16 %v410
        %v1060 = vunpack.c.l.b16 %v411
        %v1061 = vunpack.c.l.b16 %v412
        %v1062 = vunpack.c.l.b16 %v413
        %v1063 = vunpack.c.l.b16 %v414
        %v1064 = vunpack.c.l.b16 %v415
        %v1065 = vunpack.c.l.b16 %v416
        %v1066 = vunpack.c.l.b16 %v417
        %v1067 = vunpack.c.l.b16 %v418
        %v1068 = vunpack.c.l.b16 %v419
        %v1069 = vunpack.c.l.b16 %v420
        %v1070 = vunpack.c.l.b16 %v421
        %v1071 = vunpack.c.l.b16 %v422
        %v1072 = vunpack.c.l.b16 %v423
        %v1073 = vunpack.c.l.b16 %v424
        %v1074 = vunpack.c.l.b16 %v425
        %v1075 = vunpack.c.l.b16 %v426
        %v1076 = vunpack.c.l.b16 %v427
        %v1077 = vunpack.c.l.b16 %v428
        %v1078 = vunpack.c.l.b16 %v429
        %v1079 = vunpack.c.l.b16 %v430
        %v1080 = vunpack.c.l.b16 %v431
        %v1081 = vunpack.c.l.b16 %v432
        %v1082 = vunpack.c.l.b16 %v433
        %v1083 = vunpack.c.l.b16 %v434
        %v1084 = vunpack.c.l.b16 %v435
        %v1085 = vpack.c.b16 %v1054, %v1053
        %v1086 = vpack.c.b16 %v1056, %v1055
        %v1087 = vpack.c.b16 %v1058, %v1057
        %v1088 = vpack.c.b16 %v1060, %v1059
        %v1089 = vpack.c.b16 %v1062, %v1061
        %v1090 = vpack.c.b16 %v1064, %v1063
        %v1091 = vpack.c.b16 %v1066, %v1065
        %v1092 = vpack.c.b16 %v1068, %v1067
        %v1093 = vpack.c.b16 %v1070, %v1069
        %v1094 = vpack.c.b16 %v1072, %v1071
        %v1095 = vpack.c.b16 %v1074, %v1073
        %v1096 = vpack.c.b16 %v1076, %v1075
        %v1097 = vpack.c.b16 %v1078, %v1077
        %v1098 = vpack.c.b16 %v1080, %v1079
        %v1099 = vpack.c.b16 %v1082, %v1081
        %v1100 = vpack.c.b16 %v1084, %v1083
        %1117 = vmatprep.subr.bf16.mxu0 0
        %1118 = vmatpush1.bf16.msra.mxu0 %v1085
        %1119 = vmatprep.subr.bf16.mxu0 0
        %1120 = vmatpush1.bf16.msra.mxu0 %v1086
        %1121 = vmatprep.subr.bf16.mxu0 0
        %1122 = vmatpush1.bf16.msra.mxu0 %v1087
        %1123 = vmatprep.subr.bf16.mxu0 0
        %1124 = vmatpush1.bf16.msra.mxu0 %v1088
        %1125 = vmatprep.subr.bf16.mxu0 0
        %1126 = vmatpush1.bf16.msra.mxu0 %v1089
        %1127 = vmatprep.subr.bf16.mxu0 0
        %1128 = vmatpush1.bf16.msra.mxu0 %v1090
        %1129 = vmatprep.subr.bf16.mxu0 0
        %1130 = vmatpush1.bf16.msra.mxu0 %v1091
        %1131 = vmatprep.subr.bf16.mxu0 0
        %1132 = vmatpush1.bf16.msra.mxu0 %v1092
        %1133 = vmatprep.subr.bf16.mxu0 0
        %1134 = vmatpush1.bf16.msra.mxu0 %v1093
        %1135 = vmatprep.subr.bf16.mxu0 0
        %1136 = vmatpush1.bf16.msra.mxu0 %v1094
        %1137 = vmatprep.subr.bf16.mxu0 0
        %1138 = vmatpush1.bf16.msra.mxu0 %v1095
        %1139 = vmatprep.subr.bf16.mxu0 0
        %1140 = vmatpush1.bf16.msra.mxu0 %v1096
        %1141 = vmatprep.subr.bf16.mxu0 0
        %1142 = vmatpush1.bf16.msra.mxu0 %v1097
        %1143 = vmatprep.subr.bf16.mxu0 0
        %1144 = vmatpush1.bf16.msra.mxu0 %v1098
        %1145 = vmatprep.subr.bf16.mxu0 0
        %1146 = vmatpush1.bf16.msra.mxu0 %v1099
        %1147 = vmatprep.subr.bf16.mxu0 0
        %1148 = vmatpush1.bf16.msra.mxu0 %v1100
        %1149 = vmatprep.mubr.bf16.mxu0 %v1013
        %1150 = vmatmul.mubr.bf16.gmra.mrb[0].mxu0 %v1012
        %v1151 = vpop.f32.mrb[0].mxu0
        %v1152 = vadd.f32 %v1019, %v1151
        %v1153 = vpop.f32.mrb[0].mxu0
        %v1154 = vpop.f32.mrb[0].mxu0
        %v1155 = vadd.f32 %v1019, %v1154
        %v1156 = vpop.f32.mrb[0].mxu0
        %1157 = vdwg.mxu0
        %vm1158 = vcmp.gt.f32.partialorder %v1152, 0.0
        %vm1159 = vcmp.gt.f32.partialorder %v1155, 0.0
        %v1160 = vmul.f32 %v1152, 0.2
        %v1161 = vmul.f32 %v1155, 0.2
        %v1162 = vsel %vm1158, %v1152, %v1160
        %v1163 = vsel %vm1159, %v1155, %v1161
        %v1165 = vrot.slane %v1162, 7
        %v1167 = vsel %vm978, 0.0, %v1165
        %v1168 = vsel %vm978, %v1165, 0.0
        %v1170 = vrot.slane %v1167, 1
        %vm1173 = vcmask 1045504
        %v1174 = vrot.slane %v1167, 2
        %v1175 = vrot.slane %v1168, 2
        %v1176 = vsel %vm1173, %v1174, %v1175
        %vm1178 = vcmask 1044480
        %v1179 = vrot.slane %v1167, 3
        %v1180 = vrot.slane %v1168, 3
        %v1181 = vsel %vm1178, %v1179, %v1180
        %v1184 = vrot.slane %v1163, 7
        %v1186 = vsel %vm978, 0.0, %v1184
        %v1187 = vsel %vm978, %v1184, 0.0
        %v1189 = vrot.slane %v1186, 1
        %v1191 = vrot.slane %v1186, 2
        %v1192 = vrot.slane %v1187, 2
        %v1193 = vsel %vm1173, %v1191, %v1192
        %v1194 = vrot.slane %v1186, 3
        %v1195 = vrot.slane %v1187, 3
        %v1196 = vsel %vm1178, %v1194, %v1195
        %v1197 = vrot.slane %v1189, 1
        %v1198 = vrot.slane %v1193, 1
        %v1199 = vrot.slane %v1196, 1
        %v1204 = vsel %vm983, %v1167, %v1189
        %v1205 = vsel %vm983, %v1170, %v1197
        %v1206 = vsel %vm983, %v1176, %v1198
        %v1207 = vsel %vm983, %v1181, %v1199
        %v1208 = vpack.c.bf16 %v1189, %v1204
        %v1209 = vpack.c.bf16 %v1197, %v1205
        %v1210 = vpack.c.bf16 %v1198, %v1206
        %v1211 = vpack.c.bf16 %v1199, %v1207
        %v1212 = vld [vmem:[%s6] sm:$0x3]
        %v1214 = vlaneseq
        %v1215 = vshrl.u32 %v1214, 7
        %v1216 = vsub.s32 0, %v1215
        %v1217 = vrot.slane %v1212, %v1216
        %v1218 = vlaneseq
        %v1219 = vshrl.u32 %v1218, 7
        %v1220 = vsub.s32 1, %v1219
        %v1221 = vrot.slane %v1212, %v1220
        %v1288 = vunpack.c.l.b16 %v436
        %v1289 = vunpack.c.h.b16 %v436
        %v1290 = vunpack.c.l.b16 %v437
        %v1291 = vunpack.c.h.b16 %v437
        %v1292 = vunpack.c.l.b16 %v438
        %v1293 = vunpack.c.h.b16 %v438
        %v1294 = vunpack.c.l.b16 %v439
        %v1295 = vunpack.c.h.b16 %v439
        %v1296 = vunpack.c.l.b16 %v440
        %v1297 = vunpack.c.h.b16 %v440
        %v1298 = vunpack.c.l.b16 %v441
        %v1299 = vunpack.c.h.b16 %v441
        %v1300 = vunpack.c.l.b16 %v442
        %v1301 = vunpack.c.h.b16 %v442
        %v1302 = vunpack.c.l.b16 %v443
        %v1303 = vunpack.c.h.b16 %v443
        %v1304 = vunpack.c.l.b16 %v444
        %v1305 = vunpack.c.h.b16 %v444
        %v1306 = vunpack.c.l.b16 %v445
        %v1307 = vunpack.c.h.b16 %v445
        %v1308 = vunpack.c.l.b16 %v446
        %v1309 = vunpack.c.h.b16 %v446
        %v1310 = vunpack.c.l.b16 %v447
        %v1311 = vunpack.c.h.b16 %v447
        %v1312 = vunpack.c.l.b16 %v448
        %v1313 = vunpack.c.h.b16 %v448
        %v1314 = vunpack.c.l.b16 %v449
        %v1315 = vunpack.c.h.b16 %v449
        %v1316 = vunpack.c.l.b16 %v450
        %v1317 = vunpack.c.h.b16 %v450
        %v1318 = vunpack.c.l.b16 %v451
        %v1319 = vunpack.c.h.b16 %v451
        %v1320 = vunpack.c.l.b16 %v452
        %v1321 = vunpack.c.h.b16 %v452
        %v1322 = vunpack.c.l.b16 %v453
        %v1323 = vunpack.c.h.b16 %v453
        %v1324 = vunpack.c.l.b16 %v454
        %v1325 = vunpack.c.h.b16 %v454
        %v1326 = vunpack.c.l.b16 %v455
        %v1327 = vunpack.c.h.b16 %v455
        %v1328 = vunpack.c.l.b16 %v456
        %v1329 = vunpack.c.h.b16 %v456
        %v1330 = vunpack.c.l.b16 %v457
        %v1331 = vunpack.c.h.b16 %v457
        %v1332 = vunpack.c.l.b16 %v458
        %v1333 = vunpack.c.h.b16 %v458
        %v1334 = vunpack.c.l.b16 %v459
        %v1335 = vunpack.c.h.b16 %v459
        %v1336 = vunpack.c.l.b16 %v460
        %v1337 = vunpack.c.h.b16 %v460
        %v1338 = vunpack.c.l.b16 %v461
        %v1339 = vunpack.c.h.b16 %v461
        %v1340 = vunpack.c.l.b16 %v462
        %v1341 = vunpack.c.h.b16 %v462
        %v1342 = vunpack.c.l.b16 %v463
        %v1343 = vunpack.c.h.b16 %v463
        %v1344 = vunpack.c.l.b16 %v464
        %v1345 = vunpack.c.h.b16 %v464
        %v1346 = vunpack.c.l.b16 %v465
        %v1347 = vunpack.c.h.b16 %v465
        %v1348 = vunpack.c.l.b16 %v466
        %v1349 = vunpack.c.h.b16 %v466
        %v1350 = vunpack.c.l.b16 %v467
        %v1351 = vunpack.c.h.b16 %v467
        %v1352 = vunpack.c.l.b16 %v468
        %v1353 = vunpack.c.h.b16 %v468
        %v1354 = vunpack.c.l.b16 %v469
        %v1355 = vunpack.c.h.b16 %v469
        %v1356 = vunpack.c.l.b16 %v470
        %v1357 = vunpack.c.h.b16 %v470
        %v1358 = vunpack.c.l.b16 %v471
        %v1359 = vunpack.c.h.b16 %v471
        %v1360 = vunpack.c.l.b16 %v472
        %v1361 = vunpack.c.h.b16 %v472
        %v1362 = vunpack.c.l.b16 %v473
        %v1363 = vunpack.c.h.b16 %v473
        %v1364 = vunpack.c.l.b16 %v474
        %v1365 = vunpack.c.h.b16 %v474
        %v1366 = vunpack.c.l.b16 %v475
        %v1367 = vunpack.c.h.b16 %v475
        %v1368 = vunpack.c.l.b16 %v476
        %v1369 = vunpack.c.h.b16 %v476
        %v1370 = vunpack.c.l.b16 %v477
        %v1371 = vunpack.c.h.b16 %v477
        %v1372 = vunpack.c.l.b16 %v478
        %v1373 = vunpack.c.h.b16 %v478
        %v1374 = vunpack.c.l.b16 %v479
        %v1375 = vunpack.c.h.b16 %v479
        %v1376 = vunpack.c.l.b16 %v480
        %v1377 = vunpack.c.h.b16 %v480
        %v1378 = vunpack.c.l.b16 %v481
        %v1379 = vunpack.c.h.b16 %v481
        %v1380 = vunpack.c.l.b16 %v482
        %v1381 = vunpack.c.h.b16 %v482
        %v1382 = vunpack.c.l.b16 %v483
        %v1383 = vunpack.c.h.b16 %v483
        %v1384 = vunpack.c.l.b16 %v484
        %v1385 = vunpack.c.h.b16 %v484
        %v1386 = vunpack.c.l.b16 %v485
        %v1387 = vunpack.c.h.b16 %v485
        %v1388 = vunpack.c.l.b16 %v486
        %v1389 = vunpack.c.h.b16 %v486
        %v1390 = vunpack.c.l.b16 %v487
        %v1391 = vunpack.c.h.b16 %v487
        %v1392 = vunpack.c.l.b16 %v488
        %v1393 = vunpack.c.h.b16 %v488
        %v1394 = vunpack.c.l.b16 %v489
        %v1395 = vunpack.c.h.b16 %v489
        %v1396 = vunpack.c.l.b16 %v490
        %v1397 = vunpack.c.h.b16 %v490
        %v1398 = vunpack.c.l.b16 %v491
        %v1399 = vunpack.c.h.b16 %v491
        %v1400 = vunpack.c.l.b16 %v492
        %v1401 = vunpack.c.h.b16 %v492
        %v1402 = vunpack.c.l.b16 %v493
        %v1403 = vunpack.c.h.b16 %v493
        %v1404 = vunpack.c.l.b16 %v494
        %v1405 = vunpack.c.h.b16 %v494
        %v1406 = vunpack.c.l.b16 %v495
        %v1407 = vunpack.c.h.b16 %v495
        %v1408 = vunpack.c.l.b16 %v496
        %v1409 = vunpack.c.h.b16 %v496
        %v1410 = vunpack.c.l.b16 %v497
        %v1411 = vunpack.c.h.b16 %v497
        %v1412 = vunpack.c.l.b16 %v498
        %v1413 = vunpack.c.h.b16 %v498
        %v1414 = vunpack.c.l.b16 %v499
        %v1415 = vunpack.c.h.b16 %v499
        %v1416 = vpack.c.b16 %v1290, %v1288
        %v1417 = vpack.c.b16 %v1291, %v1289
        %v1418 = vpack.c.b16 %v1294, %v1292
        %v1419 = vpack.c.b16 %v1295, %v1293
        %v1420 = vpack.c.b16 %v1298, %v1296
        %v1421 = vpack.c.b16 %v1299, %v1297
        %v1422 = vpack.c.b16 %v1302, %v1300
        %v1423 = vpack.c.b16 %v1303, %v1301
        %v1424 = vpack.c.b16 %v1306, %v1304
        %v1425 = vpack.c.b16 %v1307, %v1305
        %v1426 = vpack.c.b16 %v1310, %v1308
        %v1427 = vpack.c.b16 %v1311, %v1309
        %v1428 = vpack.c.b16 %v1314, %v1312
        %v1429 = vpack.c.b16 %v1315, %v1313
        %v1430 = vpack.c.b16 %v1318, %v1316
        %v1431 = vpack.c.b16 %v1319, %v1317
        %v1432 = vpack.c.b16 %v1322, %v1320
        %v1433 = vpack.c.b16 %v1323, %v1321
        %v1434 = vpack.c.b16 %v1326, %v1324
        %v1435 = vpack.c.b16 %v1327, %v1325
        %v1436 = vpack.c.b16 %v1330, %v1328
        %v1437 = vpack.c.b16 %v1331, %v1329
        %v1438 = vpack.c.b16 %v1334, %v1332
        %v1439 = vpack.c.b16 %v1335, %v1333
        %v1440 = vpack.c.b16 %v1338, %v1336
        %v1441 = vpack.c.b16 %v1339, %v1337
        %v1442 = vpack.c.b16 %v1342, %v1340
        %v1443 = vpack.c.b16 %v1343, %v1341
        %v1444 = vpack.c.b16 %v1346, %v1344
        %v1445 = vpack.c.b16 %v1347, %v1345
        %v1446 = vpack.c.b16 %v1350, %v1348
        %v1447 = vpack.c.b16 %v1351, %v1349
        %v1448 = vpack.c.b16 %v1354, %v1352
        %v1449 = vpack.c.b16 %v1355, %v1353
        %v1450 = vpack.c.b16 %v1358, %v1356
        %v1451 = vpack.c.b16 %v1359, %v1357
        %v1452 = vpack.c.b16 %v1362, %v1360
        %v1453 = vpack.c.b16 %v1363, %v1361
        %v1454 = vpack.c.b16 %v1366, %v1364
        %v1455 = vpack.c.b16 %v1367, %v1365
        %v1456 = vpack.c.b16 %v1370, %v1368
        %v1457 = vpack.c.b16 %v1371, %v1369
        %v1458 = vpack.c.b16 %v1374, %v1372
        %v1459 = vpack.c.b16 %v1375, %v1373
        %v1460 = vpack.c.b16 %v1378, %v1376
        %v1461 = vpack.c.b16 %v1379, %v1377
        %v1462 = vpack.c.b16 %v1382, %v1380
        %v1463 = vpack.c.b16 %v1383, %v1381
        %v1464 = vpack.c.b16 %v1386, %v1384
        %v1465 = vpack.c.b16 %v1387, %v1385
        %v1466 = vpack.c.b16 %v1390, %v1388
        %v1467 = vpack.c.b16 %v1391, %v1389
        %v1468 = vpack.c.b16 %v1394, %v1392
        %v1469 = vpack.c.b16 %v1395, %v1393
        %v1470 = vpack.c.b16 %v1398, %v1396
        %v1471 = vpack.c.b16 %v1399, %v1397
        %v1472 = vpack.c.b16 %v1402, %v1400
        %v1473 = vpack.c.b16 %v1403, %v1401
        %v1474 = vpack.c.b16 %v1406, %v1404
        %v1475 = vpack.c.b16 %v1407, %v1405
        %v1476 = vpack.c.b16 %v1410, %v1408
        %v1477 = vpack.c.b16 %v1411, %v1409
        %v1478 = vpack.c.b16 %v1414, %v1412
        %v1479 = vpack.c.b16 %v1415, %v1413
        %1544 = vmatprep.subr.bf16.mxu0 %v1417
        %1545 = vmatpush1.bf16.msra.mxu0 %v1416
        %1546 = vmatprep.subr.bf16.mxu0 %v1419
        %1547 = vmatpush1.bf16.msra.mxu0 %v1418
        %1548 = vmatprep.subr.bf16.mxu0 %v1421
        %1549 = vmatpush1.bf16.msra.mxu0 %v1420
        %1550 = vmatprep.subr.bf16.mxu0 %v1423
        %1551 = vmatpush1.bf16.msra.mxu0 %v1422
        %1552 = vmatprep.subr.bf16.mxu0 %v1425
        %1553 = vmatpush1.bf16.msra.mxu0 %v1424
        %1554 = vmatprep.subr.bf16.mxu0 %v1427
        %1555 = vmatpush1.bf16.msra.mxu0 %v1426
        %1556 = vmatprep.subr.bf16.mxu0 %v1429
        %1557 = vmatpush1.bf16.msra.mxu0 %v1428
        %1558 = vmatprep.subr.bf16.mxu0 %v1431
        %1559 = vmatpush1.bf16.msra.mxu0 %v1430
        %1560 = vmatprep.subr.bf16.mxu0 %v1433
        %1561 = vmatpush1.bf16.msra.mxu0 %v1432
        %1562 = vmatprep.subr.bf16.mxu0 %v1435
        %1563 = vmatpush1.bf16.msra.mxu0 %v1434
        %1564 = vmatprep.subr.bf16.mxu0 %v1437
        %1565 = vmatpush1.bf16.msra.mxu0 %v1436
        %1566 = vmatprep.subr.bf16.mxu0 %v1439
        %1567 = vmatpush1.bf16.msra.mxu0 %v1438
        %1568 = vmatprep.subr.bf16.mxu0 %v1441
        %1569 = vmatpush1.bf16.msra.mxu0 %v1440
        %1570 = vmatprep.subr.bf16.mxu0 %v1443
        %1571 = vmatpush1.bf16.msra.mxu0 %v1442
        %1572 = vmatprep.subr.bf16.mxu0 %v1445
        %1573 = vmatpush1.bf16.msra.mxu0 %v1444
        %1574 = vmatprep.subr.bf16.mxu0 %v1447
        %1575 = vmatpush1.bf16.msra.mxu0 %v1446
        %1576 = vmatprep.mubr.bf16.mxu0 %v1209
        %1577 = vmatmul.mubr.bf16.gmra.mrb[0].mxu0 %v1208
        %v1578 = vpop.f32.mrb[0].mxu0
        %v1579 = vadd.f32 %v1217, %v1578
        %v1580 = vpop.f32.mrb[0].mxu0
        %v1581 = vadd.f32 %v1221, %v1580
        %v1582 = vpop.f32.mrb[0].mxu0
        %v1583 = vadd.f32 %v1217, %v1582
        %v1584 = vpop.f32.mrb[0].mxu0
        %v1585 = vadd.f32 %v1221, %v1584
        %1586 = vdwg.mxu0
        %1587 = vmatprep.subr.bf16.mxu0 %v1449
        %1588 = vmatpush1.bf16.msra.mxu0 %v1448
        %1589 = vmatprep.subr.bf16.mxu0 %v1451
        %1590 = vmatpush1.bf16.msra.mxu0 %v1450
        %1591 = vmatprep.subr.bf16.mxu0 %v1453
        %1592 = vmatpush1.bf16.msra.mxu0 %v1452
        %1593 = vmatprep.subr.bf16.mxu0 %v1455
        %1594 = vmatpush1.bf16.msra.mxu0 %v1454
        %1595 = vmatprep.subr.bf16.mxu0 %v1457
        %1596 = vmatpush1.bf16.msra.mxu0 %v1456
        %1597 = vmatprep.subr.bf16.mxu0 %v1459
        %1598 = vmatpush1.bf16.msra.mxu0 %v1458
        %1599 = vmatprep.subr.bf16.mxu0 %v1461
        %1600 = vmatpush1.bf16.msra.mxu0 %v1460
        %1601 = vmatprep.subr.bf16.mxu0 %v1463
        %1602 = vmatpush1.bf16.msra.mxu0 %v1462
        %1603 = vmatprep.subr.bf16.mxu0 %v1465
        %1604 = vmatpush1.bf16.msra.mxu0 %v1464
        %1605 = vmatprep.subr.bf16.mxu0 %v1467
        %1606 = vmatpush1.bf16.msra.mxu0 %v1466
        %1607 = vmatprep.subr.bf16.mxu0 %v1469
        %1608 = vmatpush1.bf16.msra.mxu0 %v1468
        %1609 = vmatprep.subr.bf16.mxu0 %v1471
        %1610 = vmatpush1.bf16.msra.mxu0 %v1470
        %1611 = vmatprep.subr.bf16.mxu0 %v1473
        %1612 = vmatpush1.bf16.msra.mxu0 %v1472
        %1613 = vmatprep.subr.bf16.mxu0 %v1475
        %1614 = vmatpush1.bf16.msra.mxu0 %v1474
        %1615 = vmatprep.subr.bf16.mxu0 %v1477
        %1616 = vmatpush1.bf16.msra.mxu0 %v1476
        %1617 = vmatprep.subr.bf16.mxu0 %v1479
        %1618 = vmatpush1.bf16.msra.mxu0 %v1478
        %1619 = vmatprep.mubr.bf16.mxu0 %v1211
        %1620 = vmatmul.mubr.bf16.gmra.mrb[0].mxu0 %v1210
        %v1621 = vpop.f32.mrb[0].mxu0
        %v1622 = vadd.f32 %v1579, %v1621
        %v1623 = vpop.f32.mrb[0].mxu0
        %v1624 = vadd.f32 %v1581, %v1623
        %v1625 = vpop.f32.mrb[0].mxu0
        %v1626 = vadd.f32 %v1583, %v1625
        %v1627 = vpop.f32.mrb[0].mxu0
        %v1628 = vadd.f32 %v1585, %v1627
        %1629 = vdwg.mxu0
        %vm1630 = vcmp.gt.f32.partialorder %v1622, 0.0
        %vm1631 = vcmp.gt.f32.partialorder %v1624, 0.0
        %vm1632 = vcmp.gt.f32.partialorder %v1626, 0.0
        %vm1633 = vcmp.gt.f32.partialorder %v1628, 0.0
        %v1634 = vmul.f32 %v1622, 0.2
        %v1635 = vmul.f32 %v1624, 0.2
        %v1636 = vmul.f32 %v1626, 0.2
        %v1637 = vmul.f32 %v1628, 0.2
        %v1638 = vsel %vm1630, %v1622, %v1634
        %v1639 = vsel %vm1631, %v1624, %v1635
        %v1640 = vsel %vm1632, %v1626, %v1636
        %v1641 = vsel %vm1633, %v1628, %v1637
        %v1642 = vld [vmem:[%s7] sm:$0xff]
        %v1643 = vld [vmem:[#allocation2] sm:$0x1]
        %s1644 = vtos %v1643
        %v1647 = vrot.slane %v1638, 1
        %v1648 = vrot.slane %v1639, 1
        %v1651 = vrot.slane %v1638, 2
        %v1652 = vrot.slane %v1639, 2
        %v1655 = vrot.slane %v1638, 3
        %v1656 = vrot.slane %v1639, 3
        %v1660 = vlaneseq
        %v1661 = vshrl.u32 %v1660, 7
        %v1662 = vsub.s32 0, %v1661
        %v1663 = vrot.slane %v1642, %v1662
        %v1664 = vlaneseq
        %v1665 = vshrl.u32 %v1664, 7
        %v1666 = vsub.s32 1, %v1665
        %v1667 = vrot.slane %v1642, %v1666
        %v1668 = vlaneseq
        %v1669 = vshrl.u32 %v1668, 7
        %v1670 = vsub.s32 2, %v1669
        %v1671 = vrot.slane %v1642, %v1670
        %v1672 = vlaneseq
        %v1673 = vshrl.u32 %v1672, 7
        %v1674 = vsub.s32 3, %v1673
        %v1675 = vrot.slane %v1642, %v1674
        %v1676 = vlaneseq
        %v1677 = vshrl.u32 %v1676, 7
        %v1678 = vsub.s32 4, %v1677
        %v1679 = vrot.slane %v1642, %v1678
        %v1680 = vlaneseq
        %v1681 = vshrl.u32 %v1680, 7
        %v1682 = vsub.s32 5, %v1681
        %v1683 = vrot.slane %v1642, %v1682
        %v1684 = vlaneseq
        %v1685 = vshrl.u32 %v1684, 7
        %v1686 = vsub.s32 6, %v1685
        %v1687 = vrot.slane %v1642, %v1686
        %v1688 = vlaneseq
        %v1689 = vshrl.u32 %v1688, 7
        %v1690 = vsub.s32 7, %v1689
        %v1691 = vrot.slane %v1642, %v1690
        %v1700 = vmul.f32 %v1638, %v1663
        %v1701 = vmul.f32 %v1639, %v1667
        %v1702 = vmul.f32 %v1647, %v1671
        %v1703 = vmul.f32 %v1648, %v1675
        %v1704 = vmul.f32 %v1651, %v1679
        %v1705 = vmul.f32 %v1652, %v1683
        %v1706 = vmul.f32 %v1655, %v1687
        %v1707 = vmul.f32 %v1656, %v1691
        %v1708 = vsel %vm526, %v1700, 0.0
        %v1709 = vsel %vm526, %v1701, 0.0
        %v1710 = vadd.f32 %v1708, %v1709
        %v1711 = vsel %vm526, %v1702, 0.0
        %v1712 = vadd.f32 %v1710, %v1711
        %v1713 = vsel %vm526, %v1703, 0.0
        %v1714 = vadd.f32 %v1712, %v1713
        %v1715 = vsel %vm526, %v1704, 0.0
        %v1716 = vadd.f32 %v1714, %v1715
        %v1717 = vsel %vm526, %v1705, 0.0
        %v1718 = vadd.f32 %v1716, %v1717
        %v1719 = vsel %vm526, %v1706, 0.0
        %v1720 = vadd.f32 %v1718, %v1719
        %v1721 = vsel %vm526, %v1707, 0.0
        %v1722 = vadd.f32 %v1720, %v1721
        %1723 = vadd.xlane.f32.xlu0 %v1722
        %v1724 = vpop.xlane.xlu0 %1723
        %v1725 = vstv %s1644
        %v1726 = vadd.f32 %v1724, %v1725
        %v1729 = vrot.slane %v1640, 1
        %v1730 = vrot.slane %v1641, 1
        %v1733 = vrot.slane %v1640, 2
        %v1734 = vrot.slane %v1641, 2
        %v1737 = vrot.slane %v1640, 3
        %v1738 = vrot.slane %v1641, 3
        %v1741 = vmul.f32 %v1729, %v1671
        %v1742 = vmul.f32 %v1730, %v1675
        %v1743 = vmul.f32 %v1733, %v1679
        %v1744 = vmul.f32 %v1734, %v1683
        %v1745 = vmul.f32 %v1737, %v1687
        %v1746 = vmul.f32 %v1738, %v1691
        %v1747 = vmul.f32 %v1640, %v1663
        %v1748 = vmul.f32 %v1641, %v1667
        %vm1749 = vcmask 1047559
        %v1750 = vsel %vm1749, %v1700, 0.0
        %v1751 = vsel %vm1749, %v1701, 0.0
        %v1752 = vadd.f32 %v1750, %v1751
        %v1753 = vsel %vm1749, %v1741, 0.0
        %v1754 = vadd.f32 %v1752, %v1753
        %v1755 = vsel %vm1749, %v1742, 0.0
        %v1756 = vadd.f32 %v1754, %v1755
        %v1757 = vsel %vm1749, %v1743, 0.0
        %v1758 = vadd.f32 %v1756, %v1757
        %v1759 = vsel %vm1749, %v1744, 0.0
        %v1760 = vadd.f32 %v1758, %v1759
        %v1761 = vsel %vm1749, %v1745, 0.0
        %v1762 = vadd.f32 %v1760, %v1761
        %v1763 = vsel %vm1749, %v1746, 0.0
        %v1764 = vadd.f32 %v1762, %v1763
        %1765 = vadd.xlane.f32.xlu0 %v1764
        %v1766 = vpop.xlane.xlu0 %1765
        %vm1767 = vcmask 1042432
        %v1768 = vsel %vm1767, %v1747, 0.0
        %v1769 = vsel %vm1767, %v1748, 0.0
        %v1770 = vadd.f32 %v1768, %v1769
        %v1771 = vsel %vm1767, %v1741, 0.0
        %v1772 = vadd.f32 %v1770, %v1771
        %v1773 = vsel %vm1767, %v1742, 0.0
        %v1774 = vadd.f32 %v1772, %v1773
        %v1775 = vsel %vm1767, %v1743, 0.0
        %v1776 = vadd.f32 %v1774, %v1775
        %v1777 = vsel %vm1767, %v1744, 0.0
        %v1778 = vadd.f32 %v1776, %v1777
        %v1779 = vsel %vm1767, %v1745, 0.0
        %v1780 = vadd.f32 %v1778, %v1779
        %v1781 = vsel %vm1767, %v1746, 0.0
        %v1782 = vadd.f32 %v1780, %v1781
        %1783 = vadd.xlane.f32.xlu0 %v1782
        %v1784 = vpop.xlane.xlu0 %1783
        %v1785 = vadd.f32 %v1766, %v1725
        %v1786 = vadd.f32 %v1784, %v1725
        %v1788 = vlaneseq
        %v1789 = vand.u32 %v1788, 127
        %v1790 = vlaneseq
        %v1791 = vshrl.u32 %v1790, 7
        %v1792 = vsub.s32 %v1789, %v1791
        %v1793 = vrot.slane %v1726, %v1792
        %v1797 = vadd.s32 %v1789, 7
        %v1798 = vlaneseq
        %v1799 = vshrl.u32 %v1798, 7
        %v1800 = vsub.s32 %v1797, %v1799
        %v1801 = vrot.slane %v1785, %v1800
        %v1802 = vadd.s32 %v1789, 4294967295
        %v1803 = vlaneseq
        %v1804 = vshrl.u32 %v1803, 7
        %v1805 = vsub.s32 %v1802, %v1804
        %v1806 = vrot.slane %v1786, %v1805
        %vm1807 = vcmask 72712
        %v1808 = vsel %vm1807, %v1806, %v1801
        %v1810 = vsel %vm978, %v1793, %v1808
        %v1813 = vunpack.c.l.s4 1966171168
        %v1814 = vunpack.c.0.s8 %v1813
        %v1815 = vlaneseq
        %v1816 = vshrl.u32 %v1815, 7
        %v1817 = vsub.s32 %v1814, %v1816
        %v1818 = vrot.slane %v1810, %v1817
        %v1819 = vcombine.high %v1818, %v1818
        %v1821 = vunpack.c.l.s4 1966171168
        %v1822 = vunpack.c.0.s8 %v1821
        %v1823 = vlaneseq
        %v1824 = vshrl.u32 %v1823, 7
        %v1825 = vsub.s32 %v1822, %v1824
        %v1826 = vrot.slane %v1818, %v1825
        %v1828 = vunpack.c.l.s4 1966171168
        %v1829 = vunpack.c.0.s8 %v1828
        %v1830 = vlaneseq
        %v1831 = vshrl.u32 %v1830, 7
        %v1832 = vsub.s32 %v1829, %v1831
        %v1833 = vrot.slane %v1819, %v1832
        %vm1836 = vcmask 24576
        %1837 = vst.msk [vmem:[%s330] sm:$0x1] %vm1836, %v1826
        %1838 = vst.msk [vmem:[%s330 + $0x1] sm:$0x1] %vm1836, %v1833
        %s1839 = sand.u32 %s227, 1
        %s1840 = scalar_lea.sflag [#allocation4], %s1839
        %s1841 = sand.u32 %s227, 1
        %s1842 = smul.addr %s1841, 2
        %s1843 = scalar_lea.vmem [#allocation3], %s1842
        // Predicated region
        $region57: #{speech2gesture_d_forward.1} parent=55 // pred_check
          %p1844 = pneg %p237
        $region58: #{speech2gesture_d_forward.1} parent=55 // pred_check_branch
          %1846 = sbr.rel (%p1844) target = $region60
        $region59: #{speech2gesture_d_forward.1} parent=55 // pred_region
          %s1847 = smul.u32 2, %s25
          %s1849 = ssub.s32 32, 32
          %1850 = vsyncadd %s1840, %s1849
          %s1851 = smul.addr %s1847, 16
          %s1852 = scalar_lea.hbm %s9, %s1851
          %s1853 = sshll.u32 %s1843, 4
          %s1854 = int_to_ptr.vmem [resolvable:$true] %s1853
          %1859 = dma.vmem_to_hbm [thread:$0]  %s1854, 32, %s1852, %s1840, 16, 16, 1
        $region60: #{speech2gesture_d_forward.1} parent=55 // pred_fallthru
          _
      $region56: #{speech2gesture_d_forward.1} parent=5 // pred_fallthru
        _
      %p1860 = scmp.le.s32.totalorder 2, %s20
      // Predicated region
      $region61: #{speech2gesture_d_forward.1} parent=5 // pred_check
        %p1861 = pneg %p1860
      $region62: #{speech2gesture_d_forward.1} parent=5 // pred_check_branch
        %1863 = sbr.rel (%p1861) target = $region64
      $region63: #{speech2gesture_d_forward.1} parent=5 // pred_region
        %s1864 = ssub.s32 %s20, 2
        // Predicated region
        $region65: #{speech2gesture_d_forward.1} parent=63 // pred_check
          %p1865 = pneg %p243
        $region66: #{speech2gesture_d_forward.1} parent=63 // pred_check_branch
          %1867 = sbr.rel (%p1865) target = $region68
        $region67: #{speech2gesture_d_forward.1} parent=63 // pred_region
          %s1868 = sand.u32 %s228, 1
          %s1869 = scalar_lea.sflag [#allocation4], %s1868
          %s1870 = sand.u32 %s228, 1
          %s1871 = smul.addr %s1870, 2
          %s1872 = scalar_lea.vmem [#allocation3], %s1871
          %1873 = dma.done %s1869, 32
        $region68: #{speech2gesture_d_forward.1} parent=63 // pred_fallthru
          _
      $region64: #{speech2gesture_d_forward.1} parent=5 // pred_fallthru
        _
    $region6: #{speech2gesture_d_forward.1} parent=1 // loop_footer
      %s24 = sadd.s32 1, %s20
    $region7: #{speech2gesture_d_forward.1} parent=1 // loop_footer_branch
      %19 = sbr.rel target = $region3
    $region8: #{speech2gesture_d_forward.1} parent=1 // loop_exit
      _
    %1874 = vsyncpa [#allocation4], 1
    %s1875 = scalar_lea.sflag [#allocation4], 1
    %1876 = vsyncpa %s1875, 1

</llo_original>
